<compile_context>
chip_gen: v7x
topology: tpu7x:2x2x1
jax: 0.10.0
libtpu: 0.0.40
codegen_flags: <defaults>
</compile_context>

<pallas_src>
import functools

import jax
import jax.numpy as jnp
from jax.experimental import pallas as pl
from jax.experimental.pallas import tpu as pltpu


VOCAB_PAD = 128    # 50  -> 128 (lane-dense one-hot)
E_PAD = 128        # 32  -> 128 (lane-dense embedding / dense activations)
HCF_PAD = 128      # 6   -> 128 (lane-dense hcf block of the merge)
HIDDEN_PAD = 256   # 200 -> 256 (MXU / lane aligned)
BN_EPS = 1e-5


# ---------------------------------------------------------------------------
# Fused forward kernel
# ---------------------------------------------------------------------------
def _ffn_fused_kernel(ids_ref, hcf_ref, emb_ref, wslab_ref, wstack_ref,
                      bias_ref, o_ref, *, batch, seq):
    f32 = jnp.float32
    n_tok = ids_ref.shape[0]        # 2 * batch * seq  (q1 tokens then q2 tokens)
    v_pad = emb_ref.shape[0]        # 128
    e_pad = emb_ref.shape[1]        # 128

    # --- embedding lookup as an exact one-hot matmul on the MXU -------------
    ids = ids_ref[...]                                                   # (T, 1) int32
    vcol = jax.lax.broadcasted_iota(jnp.int32, (n_tok, v_pad), 1)
    one_hot = jnp.where(vcol == ids, 1.0, 0.0).astype(f32)               # (T, 128)
    tok = jnp.dot(one_hot, emb_ref[...], preferred_element_type=f32)     # (T, 128)

    # --- time-distributed Linear(E, E) + ReLU over all tokens at once -------
    dense_w = wslab_ref[0:e_pad, 0:e_pad].astype(f32)                    # (128, 128)
    dense_b = bias_ref[0:1, 0:e_pad]                                     # (1, 128)
    act = jnp.dot(tok, dense_w, preferred_element_type=f32) + dense_b
    act = jnp.maximum(act, 0.0)                                          # (T, 128)

    # --- sum over the sequence axis: tile-aligned reshape + XLU reduce ------
    sums = jnp.sum(act.reshape(2 * batch, seq, e_pad), axis=1)           # (2B, 128)
    q1_sum = sums[0:batch]                                               # (B, 128)
    q2_sum = sums[batch:2 * batch]                                       # (B, 128)

    # --- merge [q1_sum | q2_sum | hcf] (all 128-lane aligned) ---------------
    merged = jnp.concatenate([q1_sum, q2_sum, hcf_ref[...]], axis=1)     # (B, 384)

    # --- fc1 -----------------------------------------------------------------
    w1 = wslab_ref[e_pad:, :].astype(f32)                                # (384, 256)
    h = jnp.dot(merged, w1, preferred_element_type=f32) + bias_ref[1:2, :]
    h = jnp.maximum(h, 0.0)                                              # (B, 256)

    # --- fc2..fc4 (eval-mode BatchNorm folded into weights / biases) --------
    for i in range(3):
        wi = wstack_ref[i].astype(f32)                                   # (256, 256)
        h = jnp.dot(h, wi, preferred_element_type=f32) + bias_ref[2 + i:3 + i, :]
        h = jnp.maximum(h, 0.0)

    # --- output layer (BN4 folded in) + sigmoid, lane-padded ----------------
    wo = wstack_ref[3].astype(f32)                                       # (256, 256), col 0 real
    logits = jnp.dot(h, wo, preferred_element_type=f32) + bias_ref[5:6, :]
    o_ref[...] = jax.nn.sigmoid(logits)                                  # (B, 256)


def _full_spec(shape):
    nd = len(shape)
    return pl.BlockSpec(shape, lambda i, _nd=nd: (0,) * _nd)


@jax.jit
def ffn_forward(kp, q1, q2, hcf):
    """Fused FFNModel forward.  q1, q2: (B, S) int32 token ids; hcf: (B, ...)."""
    B, S = q1.shape
    hcf2 = hcf.reshape(hcf.shape[0], -1)                                 # nn.Flatten
    hcf_pad = jnp.pad(hcf2.astype(jnp.float32),
                      ((0, 0), (0, HCF_PAD - hcf2.shape[1])))
    # q1 tokens then q2 tokens, row-major over (question, batch, seq).
    ids = jnp.concatenate([q1, q2], axis=0).reshape(-1, 1).astype(jnp.int32)

    args = [ids, hcf_pad, kp["emb"], kp["w_slab"], kp["w_stack"], kp["bias_slab"]]

    out = pl.pallas_call(
        functools.partial(_ffn_fused_kernel, batch=B, seq=S),
        out_shape=jax.ShapeDtypeStruct((B, HIDDEN_PAD), jnp.float32),
        grid=(1,),
        in_specs=[_full_spec(a.shape) for a in args],
        out_specs=_full_spec((B, HIDDEN_PAD)),
        compiler_params=pltpu.CompilerParams(dimension_semantics=("arbitrary",)),
    )(*args)
    return out[:, :1]                                                    # drop lane padding -> (B, 1)


# ---------------------------------------------------------------------------
# Parameters (PyTorch-style raw params + offline fold/pack/pad for the kernel)
# ---------------------------------------------------------------------------
def init_params(key, vocab_size, embedding_dim, hcf_size, hidden=200):
    """PyTorch-style parameters: weights stored as (in, out), biases as (1, out)."""
    ks = jax.random.split(key, 12)
    scale = 0.05

    def lin(k, fi, fo):
        kw, kb = jax.random.split(k)
        return (jax.random.normal(kw, (fi, fo), jnp.float32) * scale,
                jax.random.normal(kb, (1, fo), jnp.float32) * scale)

    def bn(k, n):  # (gamma, beta, running_mean, running_var)
        kg, kb, km, kv = jax.random.split(k, 4)
        return (1.0 + 0.1 * jax.random.normal(kg, (n,), jnp.float32),
                0.1 * jax.random.normal(kb, (n,), jnp.float32),
                0.1 * jax.random.normal(km, (n,), jnp.float32),
                1.0 + 0.2 * jax.random.uniform(kv, (n,), jnp.float32))

    d_in = 2 * embedding_dim + hcf_size
    p = {"emb": jax.random.normal(ks[0], (vocab_size, embedding_dim), jnp.float32) * scale}
    p["dense_w"], p["dense_b"] = lin(ks[1], embedding_dim, embedding_dim)
    p["fc1_w"], p["fc1_b"] = lin(ks[2], d_in, hidden)
    p["fc2_w"], p["fc2_b"] = lin(ks[3], hidden, hidden)
    p["fc3_w"], p["fc3_b"] = lin(ks[4], hidden, hidden)
    p["fc4_w"], p["fc4_b"] = lin(ks[5], hidden, hidden)
    p["out_w"], p["out_b"] = lin(ks[6], hidden, 1)
    p["bn1"], p["bn2"] = bn(ks[7], hidden), bn(ks[8], hidden)
    p["bn3"], p["bn4"] = bn(ks[9], hidden), bn(ks[10], hidden)
    return p


def prepare_kernel_params(raw):
    """Fold eval-mode BN into next layers, pack into slabs, zero-pad to lanes."""
    E = raw["dense_w"].shape[0]
    d_in = raw["fc1_w"].shape[0]
    hcf_size = d_in - 2 * E

    def pad2(x, rows, cols):
        return jnp.pad(x, ((0, rows - x.shape[0]), (0, cols - x.shape[1])))

    def bn_affine(name):
        gamma, beta, mean, var = raw[name]
        s = gamma / jnp.sqrt(var + BN_EPS)
        return s, beta - mean * s

    def fold(w, b, s, t):
        # (s*relu + t) @ w + b  ==  relu @ (diag(s) @ w) + (b + t @ w)
        return s[:, None] * w, b + (t @ w)[None, :]

    s1, t1 = bn_affine("bn1")
    s2, t2 = bn_affine("bn2")
    s3, t3 = bn_affine("bn3")
    s4, t4 = bn_affine("bn4")

    w2f, b2f = fold(raw["fc2_w"], raw["fc2_b"], s1, t1)
    w3f, b3f = fold(raw["fc3_w"], raw["fc3_b"], s2, t2)
    w4f, b4f = fold(raw["fc4_w"], raw["fc4_b"], s3, t3)
    wof, bof = fold(raw["out_w"], raw["out_b"], s4, t4)

    # --- embedding table, lane/vocab padded (kept f32, it is tiny) ----------
    emb_pad = pad2(raw["emb"], VOCAB_PAD, E_PAD)

    # --- packed weight slab: [dense_w ; fc1(q1 rows) ; fc1(q2 rows) ; fc1(hcf rows)]
    w1 = raw["fc1_w"]
    w_slab = jnp.concatenate([
        pad2(raw["dense_w"], E_PAD, HIDDEN_PAD),       # rows   0..127 (cols 0..127 real)
        pad2(w1[:E], E_PAD, HIDDEN_PAD),               # rows 128..255 : acts on q1_sum
        pad2(w1[E:2 * E], E_PAD, HIDDEN_PAD),          # rows 256..383 : acts on q2_sum
        pad2(w1[2 * E:], HCF_PAD, HIDDEN_PAD),         # rows 384..511 : acts on hcf
    ], axis=0).astype(jnp.bfloat16)                    # (512, 256) bf16

    # --- stacked fc2..fc4 + output weights (BN folded), bf16 ----------------
    w_stack = jnp.stack([
        pad2(w2f, HIDDEN_PAD, HIDDEN_PAD),
        pad2(w3f, HIDDEN_PAD, HIDDEN_PAD),
        pad2(w4f, HIDDEN_PAD, HIDDEN_PAD),
        pad2(wof, HIDDEN_PAD, HIDDEN_PAD),             # col 0 is the real logit
    ]).astype(jnp.bfloat16)                            # (4, 256, 256) bf16

    # --- bias slab (f32): dense_b, fc1_b, fc2..fc4 folded, output folded ----
    bias_slab = jnp.zeros((8, HIDDEN_PAD), jnp.float32)
    bias_slab = bias_slab.at[0].set(pad2(raw["dense_b"], 1, HIDDEN_PAD)[0])
    bias_slab = bias_slab.at[1].set(pad2(raw["fc1_b"], 1, HIDDEN_PAD)[0])
    bias_slab = bias_slab.at[2].set(pad2(b2f, 1, HIDDEN_PAD)[0])
    bias_slab = bias_slab.at[3].set(pad2(b3f, 1, HIDDEN_PAD)[0])
    bias_slab = bias_slab.at[4].set(pad2(b4f, 1, HIDDEN_PAD)[0])
    bias_slab = bias_slab.at[5].set(pad2(bof, 1, HIDDEN_PAD)[0])

    return dict(emb=emb_pad, w_slab=w_slab, w_stack=w_stack, bias_slab=bias_slab)


# ---------------------------------------------------------------------------
# Pure-JAX f32 reference (un-folded, un-padded) of the PyTorch eval forward
# ---------------------------------------------------------------------------
def ffn_reference(raw, q1, q2, hcf):
    hp = jax.lax.Precision.HIGHEST

    def td_sum(q):
        e = raw["emb"][q]                                                 # (B, S, E)
        d = jnp.einsum("bse,ef->bsf", e, raw["dense_w"], precision=hp) + raw["dense_b"]
        return jnp.maximum(d, 0.0).sum(axis=1)                            # (B, E)

    x = jnp.concatenate([td_sum(q1), td_sum(q2),
                         hcf.reshape(hcf.shape[0], -1)], axis=1)
    for i in (1, 2, 3, 4):
        w, b = raw[f"fc{i}_w"], raw[f"fc{i}_b"]
        gamma, beta, mean, var = raw[f"bn{i}"]
        x = jnp.maximum(jnp.matmul(x, w, precision=hp) + b, 0.0)
        x = (x - mean) * (gamma / jnp.sqrt(var + BN_EPS)) + beta           # eval-mode BN
        # dropout(p=0.2) is identity in eval mode
    return jax.nn.sigmoid(jnp.matmul(x, raw["out_w"], precision=hp) + raw["out_b"])


# ---------------------------------------------------------------------------
if __name__ == "__main__":
    VOCAB, EMB, HCF, B, S = 50, 32, 6, 2, 8

    key = jax.random.PRNGKey(0)
    k_p, k_q1, k_q2, k_h = jax.random.split(key, 4)

    raw = init_params(k_p, VOCAB, EMB, HCF)
    kparams = prepare_kernel_params(raw)

    q1 = jax.random.randint(k_q1, (B, S), 0, VOCAB, dtype=jnp.int32)
    q2 = jax.random.randint(k_q2, (B, S), 0, VOCAB, dtype=jnp.int32)
    hcf = jax.random.normal(k_h, (B, HCF), jnp.float32)

    out = jax.block_until_ready(ffn_forward(kparams, q1, q2, hcf))
    ref = ffn_reference(raw, q1, q2, hcf)

    assert out.shape == (B, 1), out.shape
    # Tolerance relaxed vs. the f32 reference: fc/output weights are stored in
    # bfloat16 (weight-only quantization, activations stay f32 in-kernel).
    assert jnp.allclose(out, ref, atol=1e-2, rtol=1e-2), (out, ref)
    print("KERNEL_OK")
</pallas_src>

<mosaic_0001>
module attributes {stable_mosaic.version = 11 : i64} {
  func.func @_ffn_fused_kernel(%arg0: i32, %arg1: memref<32x1xi32, #tpu.memory_space<vmem>>, %arg2: memref<2x128xf32, #tpu.memory_space<vmem>>, %arg3: memref<128x128xf32, #tpu.memory_space<vmem>>, %arg4: memref<512x256xbf16, #tpu.memory_space<vmem>>, %arg5: memref<4x256x256xbf16, #tpu.memory_space<vmem>>, %arg6: memref<8x256xf32, #tpu.memory_space<vmem>>, %arg7: memref<2x256xf32, #tpu.memory_space<vmem>>) attributes {dimension_semantics = [#tpu.dimension_semantics<arbitrary>], iteration_bounds = array<i64: 1>, scalar_prefetch = 0 : i64, scratch_operands = 0 : i64, tpu.core_type = #tpu.core_type<tc>, window_params = [{pipeline_mode = #tpu.pipeline_mode<synchronous>, transform_indices = @transform_0, window_bounds = array<i64: 32, 1>}, {pipeline_mode = #tpu.pipeline_mode<synchronous>, transform_indices = @transform_1, window_bounds = array<i64: 2, 128>}, {pipeline_mode = #tpu.pipeline_mode<synchronous>, transform_indices = @transform_2, window_bounds = array<i64: 128, 128>}, {pipeline_mode = #tpu.pipeline_mode<synchronous>, transform_indices = @transform_3, window_bounds = array<i64: 512, 256>}, {pipeline_mode = #tpu.pipeline_mode<synchronous>, transform_indices = @transform_4, window_bounds = array<i64: 4, 256, 256>}, {pipeline_mode = #tpu.pipeline_mode<synchronous>, transform_indices = @transform_5, window_bounds = array<i64: 8, 256>}, {pipeline_mode = #tpu.pipeline_mode<synchronous>, transform_indices = @transform_6, window_bounds = array<i64: 2, 256>}]} {
    %c0 = arith.constant 0 : index
    %c0_0 = arith.constant 0 : index
    %0 = vector.load %arg1[%c0, %c0_0] : memref<32x1xi32, #tpu.memory_space<vmem>>, vector<32x1xi32>
    %1 = tpu.iota {dimensions = array<i32: 1>} : vector<32x128xi32>
    %2 = vector.broadcast %0 : vector<32x1xi32> to vector<32x128xi32>
    %3 = arith.cmpi eq, %1, %2 : vector<32x128xi32>
    %cst = arith.constant 1.000000e+00 : f32
    %cst_1 = arith.constant 0.000000e+00 : f32
    %4 = vector.broadcast %cst : f32 to vector<32x128xf32>
    %5 = vector.broadcast %cst_1 : f32 to vector<32x128xf32>
    %6 = arith.select %3, %4, %5 : vector<32x128xi1>, vector<32x128xf32>
    %c0_2 = arith.constant 0 : index
    %c0_3 = arith.constant 0 : index
    %7 = vector.load %arg3[%c0_2, %c0_3] : memref<128x128xf32, #tpu.memory_space<vmem>>, vector<128x128xf32>
    %cst_4 = arith.constant dense<0.000000e+00> : vector<32x128xf32>
    %8 = tpu.matmul %6, %7, %cst_4 {dimension_numbers = #tpu.dot_dimension_numbers<[1], [0], [0], [1], [0, 0, 1, 1], [], []>} : vector<32x128xf32>, vector<128x128xf32>, vector<32x128xf32> -> vector<32x128xf32>
    %c0_5 = arith.constant 0 : index
    %c0_6 = arith.constant 0 : index
    %9 = vector.load %arg4[%c0_5, %c0_6] : memref<512x256xbf16, #tpu.memory_space<vmem>>, vector<128x128xbf16>
    %10 = arith.extf %9 : vector<128x128xbf16> to vector<128x128xf32>
    %c0_7 = arith.constant 0 : index
    %c0_8 = arith.constant 0 : index
    %11 = vector.load %arg6[%c0_7, %c0_8] : memref<8x256xf32, #tpu.memory_space<vmem>>, vector<1x128xf32>
    %cst_9 = arith.constant dense<0.000000e+00> : vector<32x128xf32>
    %12 = tpu.matmul %8, %10, %cst_9 {dimension_numbers = #tpu.dot_dimension_numbers<[1], [0], [0], [1], [0, 0, 1, 1], [], []>} : vector<32x128xf32>, vector<128x128xf32>, vector<32x128xf32> -> vector<32x128xf32>
    %13 = vector.broadcast %11 : vector<1x128xf32> to vector<32x128xf32>
    %14 = arith.addf %12, %13 : vector<32x128xf32>
    %cst_10 = arith.constant 0.000000e+00 : f32
    %15 = vector.broadcast %cst_10 : f32 to vector<32x128xf32>
    %16 = arith.maximumf %14, %15 : vector<32x128xf32>
    %17 = vector.shape_cast %16 : vector<32x128xf32> to vector<4x8x128xf32>
    %cst_11 = arith.constant dense<0.000000e+00> : vector<4x128xf32>
    %18 = vector.multi_reduction <add>, %17, %cst_11 [1] : vector<4x8x128xf32> to vector<4x128xf32>
    %19 = vector.extract_strided_slice %18 {offsets = [0, 0], sizes = [2, 128], strides = [1, 1]} : vector<4x128xf32> to vector<2x128xf32>
    %20 = vector.extract_strided_slice %18 {offsets = [2, 0], sizes = [2, 128], strides = [1, 1]} : vector<4x128xf32> to vector<2x128xf32>
    %c0_12 = arith.constant 0 : index
    %c0_13 = arith.constant 0 : index
    %21 = vector.load %arg2[%c0_12, %c0_13] : memref<2x128xf32, #tpu.memory_space<vmem>>, vector<2x128xf32>
    %22 = tpu.concatenate %19, %20, %21 in 1 : vector<2x128xf32>, vector<2x128xf32>, vector<2x128xf32> -> vector<2x384xf32>
    %c128 = arith.constant 128 : index
    %c0_14 = arith.constant 0 : index
    %23 = vector.load %arg4[%c128, %c0_14] : memref<512x256xbf16, #tpu.memory_space<vmem>>, vector<384x256xbf16>
    %24 = arith.extf %23 : vector<384x256xbf16> to vector<384x256xf32>
    %cst_15 = arith.constant dense<0.000000e+00> : vector<2x256xf32>
    %25 = tpu.matmul %22, %24, %cst_15 {dimension_numbers = #tpu.dot_dimension_numbers<[1], [0], [0], [1], [0, 0, 1, 1], [], []>} : vector<2x384xf32>, vector<384x256xf32>, vector<2x256xf32> -> vector<2x256xf32>
    %c1 = arith.constant 1 : index
    %c0_16 = arith.constant 0 : index
    %26 = vector.load %arg6[%c1, %c0_16] : memref<8x256xf32, #tpu.memory_space<vmem>>, vector<1x256xf32>
    %27 = vector.broadcast %26 : vector<1x256xf32> to vector<2x256xf32>
    %28 = arith.addf %25, %27 : vector<2x256xf32>
    %cst_17 = arith.constant 0.000000e+00 : f32
    %29 = vector.broadcast %cst_17 : f32 to vector<2x256xf32>
    %30 = arith.maximumf %28, %29 : vector<2x256xf32>
    %c0_18 = arith.constant 0 : index
    %c0_19 = arith.constant 0 : index
    %c0_20 = arith.constant 0 : index
    %31 = vector.load %arg5[%c0_18, %c0_19, %c0_20] : memref<4x256x256xbf16, #tpu.memory_space<vmem>>, vector<1x256x256xbf16>
    %32 = vector.shape_cast %31 : vector<1x256x256xbf16> to vector<256x256xbf16>
    %33 = arith.extf %32 : vector<256x256xbf16> to vector<256x256xf32>
    %cst_21 = arith.constant dense<0.000000e+00> : vector<2x256xf32>
    %34 = tpu.matmul %30, %33, %cst_21 {dimension_numbers = #tpu.dot_dimension_numbers<[1], [0], [0], [1], [0, 0, 1, 1], [], []>} : vector<2x256xf32>, vector<256x256xf32>, vector<2x256xf32> -> vector<2x256xf32>
    %c2 = arith.constant 2 : index
    %c0_22 = arith.constant 0 : index
    %35 = vector.load %arg6[%c2, %c0_22] : memref<8x256xf32, #tpu.memory_space<vmem>>, vector<1x256xf32>
    %36 = vector.broadcast %35 : vector<1x256xf32> to vector<2x256xf32>
    %37 = arith.addf %34, %36 : vector<2x256xf32>
    %cst_23 = arith.constant 0.000000e+00 : f32
    %38 = vector.broadcast %cst_23 : f32 to vector<2x256xf32>
    %39 = arith.maximumf %37, %38 : vector<2x256xf32>
    %c1_24 = arith.constant 1 : index
    %c0_25 = arith.constant 0 : index
    %c0_26 = arith.constant 0 : index
    %40 = vector.load %arg5[%c1_24, %c0_25, %c0_26] : memref<4x256x256xbf16, #tpu.memory_space<vmem>>, vector<1x256x256xbf16>
    %41 = vector.shape_cast %40 : vector<1x256x256xbf16> to vector<256x256xbf16>
    %42 = arith.extf %41 : vector<256x256xbf16> to vector<256x256xf32>
    %cst_27 = arith.constant dense<0.000000e+00> : vector<2x256xf32>
    %43 = tpu.matmul %39, %42, %cst_27 {dimension_numbers = #tpu.dot_dimension_numbers<[1], [0], [0], [1], [0, 0, 1, 1], [], []>} : vector<2x256xf32>, vector<256x256xf32>, vector<2x256xf32> -> vector<2x256xf32>
    %c3 = arith.constant 3 : index
    %c0_28 = arith.constant 0 : index
    %44 = vector.load %arg6[%c3, %c0_28] : memref<8x256xf32, #tpu.memory_space<vmem>>, vector<1x256xf32>
    %45 = vector.broadcast %44 : vector<1x256xf32> to vector<2x256xf32>
    %46 = arith.addf %43, %45 : vector<2x256xf32>
    %cst_29 = arith.constant 0.000000e+00 : f32
    %47 = vector.broadcast %cst_29 : f32 to vector<2x256xf32>
    %48 = arith.maximumf %46, %47 : vector<2x256xf32>
    %c2_30 = arith.constant 2 : index
    %c0_31 = arith.constant 0 : index
    %c0_32 = arith.constant 0 : index
    %49 = vector.load %arg5[%c2_30, %c0_31, %c0_32] : memref<4x256x256xbf16, #tpu.memory_space<vmem>>, vector<1x256x256xbf16>
    %50 = vector.shape_cast %49 : vector<1x256x256xbf16> to vector<256x256xbf16>
    %51 = arith.extf %50 : vector<256x256xbf16> to vector<256x256xf32>
    %cst_33 = arith.constant dense<0.000000e+00> : vector<2x256xf32>
    %52 = tpu.matmul %48, %51, %cst_33 {dimension_numbers = #tpu.dot_dimension_numbers<[1], [0], [0], [1], [0, 0, 1, 1], [], []>} : vector<2x256xf32>, vector<256x256xf32>, vector<2x256xf32> -> vector<2x256xf32>
    %c4 = arith.constant 4 : index
    %c0_34 = arith.constant 0 : index
    %53 = vector.load %arg6[%c4, %c0_34] : memref<8x256xf32, #tpu.memory_space<vmem>>, vector<1x256xf32>
    %54 = vector.broadcast %53 : vector<1x256xf32> to vector<2x256xf32>
    %55 = arith.addf %52, %54 : vector<2x256xf32>
    %cst_35 = arith.constant 0.000000e+00 : f32
    %56 = vector.broadcast %cst_35 : f32 to vector<2x256xf32>
    %57 = arith.maximumf %55, %56 : vector<2x256xf32>
    %c3_36 = arith.constant 3 : index
    %c0_37 = arith.constant 0 : index
    %c0_38 = arith.constant 0 : index
    %58 = vector.load %arg5[%c3_36, %c0_37, %c0_38] : memref<4x256x256xbf16, #tpu.memory_space<vmem>>, vector<1x256x256xbf16>
    %59 = vector.shape_cast %58 : vector<1x256x256xbf16> to vector<256x256xbf16>
    %60 = arith.extf %59 : vector<256x256xbf16> to vector<256x256xf32>
    %cst_39 = arith.constant dense<0.000000e+00> : vector<2x256xf32>
    %61 = tpu.matmul %57, %60, %cst_39 {dimension_numbers = #tpu.dot_dimension_numbers<[1], [0], [0], [1], [0, 0, 1, 1], [], []>} : vector<2x256xf32>, vector<256x256xf32>, vector<2x256xf32> -> vector<2x256xf32>
    %c5 = arith.constant 5 : index
    %c0_40 = arith.constant 0 : index
    %62 = vector.load %arg6[%c5, %c0_40] : memref<8x256xf32, #tpu.memory_space<vmem>>, vector<1x256xf32>
    %63 = vector.broadcast %62 : vector<1x256xf32> to vector<2x256xf32>
    %64 = arith.addf %61, %63 : vector<2x256xf32>
    %65 = arith.negf %64 : vector<2x256xf32>
    %66 = math.exp %65 : vector<2x256xf32>
    %cst_41 = arith.constant 1.000000e+00 : f32
    %67 = vector.broadcast %cst_41 : f32 to vector<2x256xf32>
    %68 = arith.addf %67, %66 : vector<2x256xf32>
    %69 = arith.divf %67, %68 : vector<2x256xf32>
    %c0_42 = arith.constant 0 : index
    %c0_43 = arith.constant 0 : index
    %70 = vector.load %arg7[%c0_42, %c0_43] : memref<2x256xf32, #tpu.memory_space<vmem>>, vector<2x256xf32>
    tpu.vector_store %arg7[%c0_42, %c0_43], %69 {strides = array<i32>} : memref<2x256xf32, #tpu.memory_space<vmem>>, vector<2x256xf32>,
    return
  }
  func.func @transform_0(%arg0: i32) -> (i32, i32) {
    %c0_i32 = arith.constant 0 : i32
    %c0_i32_0 = arith.constant 0 : i32
    %c0_i32_1 = arith.constant 0 : i32
    return %c0_i32, %c0_i32_0 : i32, i32
  }
  func.func @transform_1(%arg0: i32) -> (i32, i32) {
    %c0_i32 = arith.constant 0 : i32
    %c0_i32_0 = arith.constant 0 : i32
    %c0_i32_1 = arith.constant 0 : i32
    return %c0_i32, %c0_i32_0 : i32, i32
  }
  func.func @transform_2(%arg0: i32) -> (i32, i32) {
    %c0_i32 = arith.constant 0 : i32
    %c0_i32_0 = arith.constant 0 : i32
    %c0_i32_1 = arith.constant 0 : i32
    return %c0_i32, %c0_i32_0 : i32, i32
  }
  func.func @transform_3(%arg0: i32) -> (i32, i32) {
    %c0_i32 = arith.constant 0 : i32
    %c0_i32_0 = arith.constant 0 : i32
    %c0_i32_1 = arith.constant 0 : i32
    return %c0_i32, %c0_i32_0 : i32, i32
  }
  func.func @transform_4(%arg0: i32) -> (i32, i32, i32) {
    %c0_i32 = arith.constant 0 : i32
    %c0_i32_0 = arith.constant 0 : i32
    %c0_i32_1 = arith.constant 0 : i32
    %c0_i32_2 = arith.constant 0 : i32
    return %c0_i32, %c0_i32_0, %c0_i32_1 : i32, i32, i32
  }
  func.func @transform_5(%arg0: i32) -> (i32, i32) {
    %c0_i32 = arith.constant 0 : i32
    %c0_i32_0 = arith.constant 0 : i32
    %c0_i32_1 = arith.constant 0 : i32
    return %c0_i32, %c0_i32_0 : i32, i32
  }
  func.func @transform_6(%arg0: i32) -> (i32, i32) {
    %c0_i32 = arith.constant 0 : i32
    %c0_i32_0 = arith.constant 0 : i32
    %c0_i32_1 = arith.constant 0 : i32
    return %c0_i32, %c0_i32_0 : i32, i32
  }
}

</mosaic_0001>

<llo_original>
// kernel: ffn_forward.1
$region0: #{ffn_forward.1}
  #allocation0 [shape = 'u32[]', space=smem, size = 0x4, offset = 0x4, fixed_abs, tag = 'smem constant byte address 0x4 - core index']
  #allocation1 [shape = 'u32[144,128]{1,0:T(1,128)}', space=vmem, size = 0x12000, scoped, tag = 'internal scratch']
  %s0 = inlined_call_operand.vmem [shape: s32[32,1], index: 0, kind: input, shape index: {}]
  %s1 = inlined_call_operand.vmem [shape: f32[2,128], index: 1, kind: input, shape index: {}]
  %s2 = inlined_call_operand.hbm [shape: f32[128,128], index: 2, kind: input, shape index: {}]
  %s3 = inlined_call_operand.hbm [shape: bf16[512,256], index: 3, kind: input, shape index: {}]
  %s4 = inlined_call_operand.hbm [shape: bf16[4,256,256], index: 4, kind: input, shape index: {}]
  %s5 = inlined_call_operand.vmem [shape: f32[8,256], index: 5, kind: input, shape index: {}]
  %s6 = inlined_call_operand.vmem [shape: f32[2,256], index: 6, kind: output, shape index: {}]
  %s7 = sld [smem:[#allocation0]]
  $region46: #{ffn_forward.1} parent=0
    _
  %s9 = ssub.s32 1, %s7
  %s10 = scalar_select 0, %s9, %s7
  $region1: #{ffn_forward.1} parent=0
    #allocation2 [shape = 'u8[65536]{0}', space=vmem, size = 0x10000, scoped, tag = 'input window, operand 2, single buffered']
    #allocation3 [shape = 's32[1]{0}', space=sflag, size = 0x4, scoped, tag = 'scoped memory for ffn_forward.1']
    #allocation4 [shape = 'u8[262144]{0}', space=vmem, size = 0x40000, scoped, tag = 'input window, operand 3, single buffered']
    #allocation5 [shape = 's32[1]{0}', space=sflag, size = 0x4, scoped, tag = 'scoped memory for ffn_forward.1']
    #allocation6 [shape = 'u8[524288]{0}', space=vmem, size = 0x80000, scoped, tag = 'input window, operand 4, single buffered']
    %11 = vsyncpa [#allocation3], 0
    %12 = vsyncpa [#allocation5], 0
    // Predicated region
    $region2: #{ffn_forward.1} parent=1 // pred_check
      _
    $region3: #{ffn_forward.1} parent=1 // pred_check_branch
      %14 = sbr.rel (0) target = $region5
    $region4: #{ffn_forward.1} parent=1 // pred_region
      _
    $region5: #{ffn_forward.1} parent=1 // pred_fallthru
      _
    // Predicated region
    $region6: #{ffn_forward.1} parent=1 // pred_check
      _
    $region7: #{ffn_forward.1} parent=1 // pred_check_branch
      %16 = sbr.rel (0) target = $region9
    $region8: #{ffn_forward.1} parent=1 // pred_region
      _
    $region9: #{ffn_forward.1} parent=1 // pred_fallthru
      _
    // Predicated region
    $region10: #{ffn_forward.1} parent=1 // pred_check
      _
    $region11: #{ffn_forward.1} parent=1 // pred_check_branch
      %18 = sbr.rel (0) target = $region13
    $region12: #{ffn_forward.1} parent=1 // pred_region
      %s20 = ssub.s32 2048, 2048
      %21 = vsyncadd [#allocation3], %s20
      %s22 = sshll.u32 [#allocation2], 4
      %s23 = int_to_ptr.vmem [resolvable:$true] %s22
      %28 = dma.hbm_to_vmem [thread:$0]  %s2, 2048, %s23, [#allocation3], 128, 128, 8
    $region13: #{ffn_forward.1} parent=1 // pred_fallthru
      _
    // Predicated region
    $region14: #{ffn_forward.1} parent=1 // pred_check
      _
    $region15: #{ffn_forward.1} parent=1 // pred_check_branch
      %30 = sbr.rel (0) target = $region17
    $region16: #{ffn_forward.1} parent=1 // pred_region
      %s32 = ssub.s32 8192, 8192
      %33 = vsyncadd [#allocation5], %s32
      %s34 = sshll.u32 [#allocation4], 4
      %s35 = int_to_ptr.vmem [resolvable:$true] %s34
      %40 = dma.hbm_to_vmem [thread:$0]  %s3, 8192, %s35, [#allocation5], 128, 128, 8
    $region17: #{ffn_forward.1} parent=1 // pred_fallthru
      _
    // Predicated region
    $region18: #{ffn_forward.1} parent=1 // pred_check
      _
    $region19: #{ffn_forward.1} parent=1 // pred_check_branch
      %42 = sbr.rel (0) target = $region21
    $region20: #{ffn_forward.1} parent=1 // pred_region
      %s44 = ssub.s32 16384, 16384
      %45 = vsyncadd [#allocation5], %s44
      %s46 = sshll.u32 [#allocation6], 4
      %s47 = int_to_ptr.vmem [resolvable:$true] %s46
      %52 = dma.hbm_to_vmem [thread:$0]  %s4, 16384, %s47, [#allocation5], 128, 128, 8
    $region21: #{ffn_forward.1} parent=1 // pred_fallthru
      _
    // Predicated region
    $region22: #{ffn_forward.1} parent=1 // pred_check
      _
    $region23: #{ffn_forward.1} parent=1 // pred_check_branch
      %54 = sbr.rel (0) target = $region25
    $region24: #{ffn_forward.1} parent=1 // pred_region
      _
    $region25: #{ffn_forward.1} parent=1 // pred_fallthru
      _
    // Predicated region
    $region26: #{ffn_forward.1} parent=1 // pred_check
      _
    $region27: #{ffn_forward.1} parent=1 // pred_check_branch
      %56 = sbr.rel (0) target = $region29
    $region28: #{ffn_forward.1} parent=1 // pred_region
      %57 = dma.done [#allocation3], 2048
    $region29: #{ffn_forward.1} parent=1 // pred_fallthru
      _
    // Predicated region
    $region30: #{ffn_forward.1} parent=1 // pred_check
      _
    $region31: #{ffn_forward.1} parent=1 // pred_check_branch
      %59 = sbr.rel (0) target = $region33
    $region32: #{ffn_forward.1} parent=1 // pred_region
      %60 = dma.done [#allocation5], 8192
    $region33: #{ffn_forward.1} parent=1 // pred_fallthru
      _
    // Predicated region
    $region34: #{ffn_forward.1} parent=1 // pred_check
      _
    $region35: #{ffn_forward.1} parent=1 // pred_check_branch
      %62 = sbr.rel (0) target = $region37
    $region36: #{ffn_forward.1} parent=1 // pred_region
      %63 = dma.done [#allocation5], 16384
    $region37: #{ffn_forward.1} parent=1 // pred_fallthru
      _
    %v64 = vld [vmem:[%s0] sm:$0xff]
    %v65 = vld [vmem:[%s0 + $0x8] sm:$0xff]
    %v66 = vld [vmem:[%s0 + $0x10] sm:$0xff]
    %v67 = vld [vmem:[%s0 + $0x18] sm:$0xff]
    %v68 = vlaneseq
    %v69 = vand.u32 %v68, 127
    %70 = vset.pattern.permute.xlu0 0
    %71 = vperm.xlu0 %70, %v64
    %v72 = vpop.permute.xlu0 %71
    %73 = vset.pattern.permute.xlu0 0
    %74 = vperm.xlu0 %73, %v65
    %v75 = vpop.permute.xlu0 %74
    %76 = vset.pattern.permute.xlu0 0
    %77 = vperm.xlu0 %76, %v66
    %v78 = vpop.permute.xlu0 %77
    %79 = vset.pattern.permute.xlu0 0
    %80 = vperm.xlu0 %79, %v67
    %v81 = vpop.permute.xlu0 %80
    %vm82 = vcmp.eq.s32.totalorder %v69, %v72
    %vm83 = vcmp.eq.s32.totalorder %v69, %v75
    %vm84 = vcmp.eq.s32.totalorder %v69, %v78
    %vm85 = vcmp.eq.s32.totalorder %v69, %v81
    %v86 = vsel %vm82, 1.0, 0.0
    %v87 = vsel %vm83, 1.0, 0.0
    %v88 = vsel %vm84, 1.0, 0.0
    %v89 = vsel %vm85, 1.0, 0.0
    %v90 = vld [vmem:[#allocation2] sm:$0xff]
    %v91 = vld [vmem:[#allocation2 + $0x8] sm:$0xff]
    %v92 = vld [vmem:[#allocation2 + $0x10] sm:$0xff]
    %v93 = vld [vmem:[#allocation2 + $0x18] sm:$0xff]
    %v94 = vld [vmem:[#allocation2 + $0x20] sm:$0xff]
    %v95 = vld [vmem:[#allocation2 + $0x28] sm:$0xff]
    %v96 = vld [vmem:[#allocation2 + $0x30] sm:$0xff]
    %v97 = vld [vmem:[#allocation2 + $0x38] sm:$0xff]
    %v98 = vld [vmem:[#allocation2 + $0x40] sm:$0xff]
    %v99 = vld [vmem:[#allocation2 + $0x48] sm:$0xff]
    %v100 = vld [vmem:[#allocation2 + $0x50] sm:$0xff]
    %v101 = vld [vmem:[#allocation2 + $0x58] sm:$0xff]
    %v102 = vld [vmem:[#allocation2 + $0x60] sm:$0xff]
    %v103 = vld [vmem:[#allocation2 + $0x68] sm:$0xff]
    %v104 = vld [vmem:[#allocation2 + $0x70] sm:$0xff]
    %v105 = vld [vmem:[#allocation2 + $0x78] sm:$0xff]
    %106 = vmatprep.subr.mxu0 0.0
    %107 = vmatpush1.msra.mxu0 %v90
    %108 = vmatprep.subr.mxu0 0.0
    %109 = vmatpush1.msra.mxu0 %v91
    %110 = vmatprep.subr.mxu0 0.0
    %111 = vmatpush1.msra.mxu0 %v92
    %112 = vmatprep.subr.mxu0 0.0
    %113 = vmatpush1.msra.mxu0 %v93
    %114 = vmatprep.subr.mxu0 0.0
    %115 = vmatpush1.msra.mxu0 %v94
    %116 = vmatprep.subr.mxu0 0.0
    %117 = vmatpush1.msra.mxu0 %v95
    %118 = vmatprep.subr.mxu0 0.0
    %119 = vmatpush1.msra.mxu0 %v96
    %120 = vmatprep.subr.mxu0 0.0
    %121 = vmatpush1.msra.mxu0 %v97
    %122 = vmatprep.subr.mxu0 0.0
    %123 = vmatpush1.msra.mxu0 %v98
    %124 = vmatprep.subr.mxu0 0.0
    %125 = vmatpush1.msra.mxu0 %v99
    %126 = vmatprep.subr.mxu0 0.0
    %127 = vmatpush1.msra.mxu0 %v100
    %128 = vmatprep.subr.mxu0 0.0
    %129 = vmatpush1.msra.mxu0 %v101
    %130 = vmatprep.subr.mxu0 0.0
    %131 = vmatpush1.msra.mxu0 %v102
    %132 = vmatprep.subr.mxu0 0.0
    %133 = vmatpush1.msra.mxu0 %v103
    %134 = vmatprep.subr.mxu0 0.0
    %135 = vmatpush1.msra.mxu0 %v104
    %136 = vmatprep.subr.mxu0 0.0
    %137 = vmatpush1.msra.mxu0 %v105
    %138 = vmatprep.subr.mxu0 0.0
    %139 = vmatpush1.msra.mxu0 0.0
    %140 = vmatprep.subr.mxu0 0.0
    %141 = vmatpush1.msra.mxu0 0.0
    %142 = vmatprep.subr.mxu0 0.0
    %143 = vmatpush1.msra.mxu0 0.0
    %144 = vmatprep.subr.mxu0 0.0
    %145 = vmatpush1.msra.mxu0 0.0
    %146 = vmatprep.subr.mxu0 0.0
    %147 = vmatpush1.msra.mxu0 0.0
    %148 = vmatprep.subr.mxu0 0.0
    %149 = vmatpush1.msra.mxu0 0.0
    %150 = vmatprep.subr.mxu0 0.0
    %151 = vmatpush1.msra.mxu0 0.0
    %152 = vmatprep.subr.mxu0 0.0
    %153 = vmatpush1.msra.mxu0 0.0
    %154 = vmatprep.subr.mxu0 0.0
    %155 = vmatpush1.msra.mxu0 0.0
    %156 = vmatprep.subr.mxu0 0.0
    %157 = vmatpush1.msra.mxu0 0.0
    %158 = vmatprep.subr.mxu0 0.0
    %159 = vmatpush1.msra.mxu0 0.0
    %160 = vmatprep.subr.mxu0 0.0
    %161 = vmatpush1.msra.mxu0 0.0
    %162 = vmatprep.subr.mxu0 0.0
    %163 = vmatpush1.msra.mxu0 0.0
    %164 = vmatprep.subr.mxu0 0.0
    %165 = vmatpush1.msra.mxu0 0.0
    %166 = vmatprep.subr.mxu0 0.0
    %167 = vmatpush1.msra.mxu0 0.0
    %168 = vmatprep.subr.mxu0 0.0
    %169 = vmatpush1.msra.mxu0 0.0
    %170 = vmatprep.mubr.f32.mxu0 0.0
    %171 = vmatmul.mubr.f32.gmra.mrb[0].mxu0 %v86
    %v172 = vpop.f32.mrb[0].mxu0
    %v173 = vadd.f32 0.0, %v172
    %v174 = vpop.f32.mrb[0].mxu0
    %175 = vmatprep.mubr.f32.mxu0 0.0
    %176 = vmatmul.mubr.f32.gmra.mrb[0].mxu0 %v87
    %v177 = vpop.f32.mrb[0].mxu0
    %v178 = vadd.f32 0.0, %v177
    %v179 = vpop.f32.mrb[0].mxu0
    %180 = vmatprep.mubr.f32.mxu0 0.0
    %181 = vmatmul.mubr.f32.gmra.mrb[0].mxu0 %v88
    %v182 = vpop.f32.mrb[0].mxu0
    %v183 = vadd.f32 0.0, %v182
    %v184 = vpop.f32.mrb[0].mxu0
    %185 = vmatprep.mubr.f32.mxu0 0.0
    %186 = vmatmul.mubr.f32.gmra.mrb[0].mxu0 %v89
    %v187 = vpop.f32.mrb[0].mxu0
    %v188 = vadd.f32 0.0, %v187
    %v189 = vpop.f32.mrb[0].mxu0
    %190 = vdwg.mxu0
    %v191 = vld [vmem:[#allocation4] sm:$0xf]
    %v192 = vld [vmem:[#allocation4 + $0x8] sm:$0xf]
    %v193 = vld [vmem:[#allocation4 + $0x10] sm:$0xf]
    %v194 = vld [vmem:[#allocation4 + $0x18] sm:$0xf]
    %v195 = vld [vmem:[#allocation4 + $0x20] sm:$0xf]
    %v196 = vld [vmem:[#allocation4 + $0x28] sm:$0xf]
    %v197 = vld [vmem:[#allocation4 + $0x30] sm:$0xf]
    %v198 = vld [vmem:[#allocation4 + $0x38] sm:$0xf]
    %v199 = vld [vmem:[#allocation4 + $0x40] sm:$0xf]
    %v200 = vld [vmem:[#allocation4 + $0x48] sm:$0xf]
    %v201 = vld [vmem:[#allocation4 + $0x50] sm:$0xf]
    %v202 = vld [vmem:[#allocation4 + $0x58] sm:$0xf]
    %v203 = vld [vmem:[#allocation4 + $0x60] sm:$0xf]
    %v204 = vld [vmem:[#allocation4 + $0x68] sm:$0xf]
    %v205 = vld [vmem:[#allocation4 + $0x70] sm:$0xf]
    %v206 = vld [vmem:[#allocation4 + $0x78] sm:$0xf]
    %v207 = vunpack.c.l.bf16 %v191
    %v208 = vunpack.c.l.bf16 %v192
    %v209 = vunpack.c.l.bf16 %v193
    %v210 = vunpack.c.l.bf16 %v194
    %v211 = vunpack.c.l.bf16 %v195
    %v212 = vunpack.c.l.bf16 %v196
    %v213 = vunpack.c.l.bf16 %v197
    %v214 = vunpack.c.l.bf16 %v198
    %v215 = vunpack.c.l.bf16 %v199
    %v216 = vunpack.c.l.bf16 %v200
    %v217 = vunpack.c.l.bf16 %v201
    %v218 = vunpack.c.l.bf16 %v202
    %v219 = vunpack.c.l.bf16 %v203
    %v220 = vunpack.c.l.bf16 %v204
    %v221 = vunpack.c.l.bf16 %v205
    %v222 = vunpack.c.l.bf16 %v206
    %v223 = vld [vmem:[%s5] ss:$0 sm:$0xff]
    %224 = vmatprep.subr.mxu0 0.0
    %225 = vmatpush1.msra.mxu0 %v207
    %226 = vmatprep.subr.mxu0 0.0
    %227 = vmatpush1.msra.mxu0 %v208
    %228 = vmatprep.subr.mxu0 0.0
    %229 = vmatpush1.msra.mxu0 %v209
    %230 = vmatprep.subr.mxu0 0.0
    %231 = vmatpush1.msra.mxu0 %v210
    %232 = vmatprep.subr.mxu0 0.0
    %233 = vmatpush1.msra.mxu0 %v211
    %234 = vmatprep.subr.mxu0 0.0
    %235 = vmatpush1.msra.mxu0 %v212
    %236 = vmatprep.subr.mxu0 0.0
    %237 = vmatpush1.msra.mxu0 %v213
    %238 = vmatprep.subr.mxu0 0.0
    %239 = vmatpush1.msra.mxu0 %v214
    %240 = vmatprep.subr.mxu0 0.0
    %241 = vmatpush1.msra.mxu0 %v215
    %242 = vmatprep.subr.mxu0 0.0
    %243 = vmatpush1.msra.mxu0 %v216
    %244 = vmatprep.subr.mxu0 0.0
    %245 = vmatpush1.msra.mxu0 %v217
    %246 = vmatprep.subr.mxu0 0.0
    %247 = vmatpush1.msra.mxu0 %v218
    %248 = vmatprep.subr.mxu0 0.0
    %249 = vmatpush1.msra.mxu0 %v219
    %250 = vmatprep.subr.mxu0 0.0
    %251 = vmatpush1.msra.mxu0 %v220
    %252 = vmatprep.subr.mxu0 0.0
    %253 = vmatpush1.msra.mxu0 %v221
    %254 = vmatprep.subr.mxu0 0.0
    %255 = vmatpush1.msra.mxu0 %v222
    %256 = vmatprep.subr.mxu0 0.0
    %257 = vmatpush1.msra.mxu0 0.0
    %258 = vmatprep.subr.mxu0 0.0
    %259 = vmatpush1.msra.mxu0 0.0
    %260 = vmatprep.subr.mxu0 0.0
    %261 = vmatpush1.msra.mxu0 0.0
    %262 = vmatprep.subr.mxu0 0.0
    %263 = vmatpush1.msra.mxu0 0.0
    %264 = vmatprep.subr.mxu0 0.0
    %265 = vmatpush1.msra.mxu0 0.0
    %266 = vmatprep.subr.mxu0 0.0
    %267 = vmatpush1.msra.mxu0 0.0
    %268 = vmatprep.subr.mxu0 0.0
    %269 = vmatpush1.msra.mxu0 0.0
    %270 = vmatprep.subr.mxu0 0.0
    %271 = vmatpush1.msra.mxu0 0.0
    %272 = vmatprep.subr.mxu0 0.0
    %273 = vmatpush1.msra.mxu0 0.0
    %274 = vmatprep.subr.mxu0 0.0
    %275 = vmatpush1.msra.mxu0 0.0
    %276 = vmatprep.subr.mxu0 0.0
    %277 = vmatpush1.msra.mxu0 0.0
    %278 = vmatprep.subr.mxu0 0.0
    %279 = vmatpush1.msra.mxu0 0.0
    %280 = vmatprep.subr.mxu0 0.0
    %281 = vmatpush1.msra.mxu0 0.0
    %282 = vmatprep.subr.mxu0 0.0
    %283 = vmatpush1.msra.mxu0 0.0
    %284 = vmatprep.subr.mxu0 0.0
    %285 = vmatpush1.msra.mxu0 0.0
    %286 = vmatprep.subr.mxu0 0.0
    %287 = vmatpush1.msra.mxu0 0.0
    %288 = vmatprep.mubr.f32.mxu0 0.0
    %289 = vmatmul.mubr.f32.gmra.mrb[0].mxu0 %v173
    %v290 = vpop.f32.mrb[0].mxu0
    %v291 = vadd.f32 %v223, %v290
    %v292 = vpop.f32.mrb[0].mxu0
    %293 = vmatprep.mubr.f32.mxu0 0.0
    %294 = vmatmul.mubr.f32.gmra.mrb[0].mxu0 %v178
    %v295 = vpop.f32.mrb[0].mxu0
    %v296 = vadd.f32 %v223, %v295
    %v297 = vpop.f32.mrb[0].mxu0
    %298 = vmatprep.mubr.f32.mxu0 0.0
    %299 = vmatmul.mubr.f32.gmra.mrb[0].mxu0 %v183
    %v300 = vpop.f32.mrb[0].mxu0
    %v301 = vadd.f32 %v223, %v300
    %v302 = vpop.f32.mrb[0].mxu0
    %303 = vmatprep.mubr.f32.mxu0 0.0
    %304 = vmatmul.mubr.f32.gmra.mrb[0].mxu0 %v188
    %v305 = vpop.f32.mrb[0].mxu0
    %v306 = vadd.f32 %v223, %v305
    %v307 = vpop.f32.mrb[0].mxu0
    %308 = vdwg.mxu0
    %v309 = vmax.f32 %v291, 0.0
    %v310 = vmax.f32 %v296, 0.0
    %v311 = vmax.f32 %v301, 0.0
    %v312 = vmax.f32 %v306, 0.0
    %v313 = vrot.slane %v309, 4
    %v314 = vadd.f32 %v309, %v313
    %v315 = vrot.slane %v314, 2
    %v316 = vadd.f32 %v314, %v315
    %v317 = vrot.slane %v316, 1
    %v318 = vadd.f32 %v316, %v317
    %v319 = vrot.slane %v310, 4
    %v320 = vadd.f32 %v310, %v319
    %v321 = vrot.slane %v320, 2
    %v322 = vadd.f32 %v320, %v321
    %v323 = vrot.slane %v322, 1
    %v324 = vadd.f32 %v322, %v323
    %v325 = vrot.slane %v311, 4
    %v326 = vadd.f32 %v311, %v325
    %v327 = vrot.slane %v326, 2
    %v328 = vadd.f32 %v326, %v327
    %v329 = vrot.slane %v328, 1
    %v330 = vadd.f32 %v328, %v329
    %v331 = vrot.slane %v312, 4
    %v332 = vadd.f32 %v312, %v331
    %v333 = vrot.slane %v332, 2
    %v334 = vadd.f32 %v332, %v333
    %v335 = vrot.slane %v334, 1
    %v336 = vadd.f32 %v334, %v335
    %v337 = vld [vmem:[%s1] sm:$0x3]
    %vm340 = vcmask 1041409
    %v341 = vsel %vm340, %v324, %v318
    %v345 = vsel %vm340, %v336, %v330
    %v347 = vld [vmem:[#allocation4 + $0x80] sm:$0xff]
    %v348 = vld [vmem:[#allocation4 + $0x88] sm:$0xff]
    %v349 = vld [vmem:[#allocation4 + $0x90] sm:$0xff]
    %v350 = vld [vmem:[#allocation4 + $0x98] sm:$0xff]
    %v351 = vld [vmem:[#allocation4 + $0xa0] sm:$0xff]
    %v352 = vld [vmem:[#allocation4 + $0xa8] sm:$0xff]
    %v353 = vld [vmem:[#allocation4 + $0xb0] sm:$0xff]
    %v354 = vld [vmem:[#allocation4 + $0xb8] sm:$0xff]
    %v355 = vld [vmem:[#allocation4 + $0xc0] sm:$0xff]
    %v356 = vld [vmem:[#allocation4 + $0xc8] sm:$0xff]
    %v357 = vld [vmem:[#allocation4 + $0xd0] sm:$0xff]
    %v358 = vld [vmem:[#allocation4 + $0xd8] sm:$0xff]
    %v359 = vld [vmem:[#allocation4 + $0xe0] sm:$0xff]
    %v360 = vld [vmem:[#allocation4 + $0xe8] sm:$0xff]
    %v361 = vld [vmem:[#allocation4 + $0xf0] sm:$0xff]
    %v362 = vld [vmem:[#allocation4 + $0xf8] sm:$0xff]
    %v363 = vld [vmem:[#allocation4 + $0x100] sm:$0xff]
    %v364 = vld [vmem:[#allocation4 + $0x108] sm:$0xff]
    %v365 = vld [vmem:[#allocation4 + $0x110] sm:$0xff]
    %v366 = vld [vmem:[#allocation4 + $0x118] sm:$0xff]
    %v367 = vld [vmem:[#allocation4 + $0x120] sm:$0xff]
    %v368 = vld [vmem:[#allocation4 + $0x128] sm:$0xff]
    %v369 = vld [vmem:[#allocation4 + $0x130] sm:$0xff]
    %v370 = vld [vmem:[#allocation4 + $0x138] sm:$0xff]
    %v371 = vld [vmem:[#allocation4 + $0x140] sm:$0xff]
    %v372 = vld [vmem:[#allocation4 + $0x148] sm:$0xff]
    %v373 = vld [vmem:[#allocation4 + $0x150] sm:$0xff]
    %v374 = vld [vmem:[#allocation4 + $0x158] sm:$0xff]
    %v375 = vld [vmem:[#allocation4 + $0x160] sm:$0xff]
    %v376 = vld [vmem:[#allocation4 + $0x168] sm:$0xff]
    %v377 = vld [vmem:[#allocation4 + $0x170] sm:$0xff]
    %v378 = vld [vmem:[#allocation4 + $0x178] sm:$0xff]
    %v379 = vld [vmem:[#allocation4 + $0x180] sm:$0xff]
    %v380 = vld [vmem:[#allocation4 + $0x188] sm:$0xff]
    %v381 = vld [vmem:[#allocation4 + $0x190] sm:$0xff]
    %v382 = vld [vmem:[#allocation4 + $0x198] sm:$0xff]
    %v383 = vld [vmem:[#allocation4 + $0x1a0] sm:$0xff]
    %v384 = vld [vmem:[#allocation4 + $0x1a8] sm:$0xff]
    %v385 = vld [vmem:[#allocation4 + $0x1b0] sm:$0xff]
    %v386 = vld [vmem:[#allocation4 + $0x1b8] sm:$0xff]
    %v387 = vld [vmem:[#allocation4 + $0x1c0] sm:$0xff]
    %v388 = vld [vmem:[#allocation4 + $0x1c8] sm:$0xff]
    %v389 = vld [vmem:[#allocation4 + $0x1d0] sm:$0xff]
    %v390 = vld [vmem:[#allocation4 + $0x1d8] sm:$0xff]
    %v391 = vld [vmem:[#allocation4 + $0x1e0] sm:$0xff]
    %v392 = vld [vmem:[#allocation4 + $0x1e8] sm:$0xff]
    %v393 = vld [vmem:[#allocation4 + $0x1f0] sm:$0xff]
    %v394 = vld [vmem:[#allocation4 + $0x1f8] sm:$0xff]
    %v395 = vunpack.c.l.bf16 %v347
    %v396 = vunpack.c.h.bf16 %v347
    %v397 = vunpack.c.l.bf16 %v348
    %v398 = vunpack.c.h.bf16 %v348
    %v399 = vunpack.c.l.bf16 %v349
    %v400 = vunpack.c.h.bf16 %v349
    %v401 = vunpack.c.l.bf16 %v350
    %v402 = vunpack.c.h.bf16 %v350
    %v403 = vunpack.c.l.bf16 %v351
    %v404 = vunpack.c.h.bf16 %v351
    %v405 = vunpack.c.l.bf16 %v352
    %v406 = vunpack.c.h.bf16 %v352
    %v407 = vunpack.c.l.bf16 %v353
    %v408 = vunpack.c.h.bf16 %v353
    %v409 = vunpack.c.l.bf16 %v354
    %v410 = vunpack.c.h.bf16 %v354
    %v411 = vunpack.c.l.bf16 %v355
    %v412 = vunpack.c.h.bf16 %v355
    %v413 = vunpack.c.l.bf16 %v356
    %v414 = vunpack.c.h.bf16 %v356
    %v415 = vunpack.c.l.bf16 %v357
    %v416 = vunpack.c.h.bf16 %v357
    %v417 = vunpack.c.l.bf16 %v358
    %v418 = vunpack.c.h.bf16 %v358
    %v419 = vunpack.c.l.bf16 %v359
    %v420 = vunpack.c.h.bf16 %v359
    %v421 = vunpack.c.l.bf16 %v360
    %v422 = vunpack.c.h.bf16 %v360
    %v423 = vunpack.c.l.bf16 %v361
    %v424 = vunpack.c.h.bf16 %v361
    %v425 = vunpack.c.l.bf16 %v362
    %v426 = vunpack.c.h.bf16 %v362
    %v427 = vunpack.c.l.bf16 %v363
    %v428 = vunpack.c.h.bf16 %v363
    %v429 = vunpack.c.l.bf16 %v364
    %v430 = vunpack.c.h.bf16 %v364
    %v431 = vunpack.c.l.bf16 %v365
    %v432 = vunpack.c.h.bf16 %v365
    %v433 = vunpack.c.l.bf16 %v366
    %v434 = vunpack.c.h.bf16 %v366
    %v435 = vunpack.c.l.bf16 %v367
    %v436 = vunpack.c.h.bf16 %v367
    %v437 = vunpack.c.l.bf16 %v368
    %v438 = vunpack.c.h.bf16 %v368
    %v439 = vunpack.c.l.bf16 %v369
    %v440 = vunpack.c.h.bf16 %v369
    %v441 = vunpack.c.l.bf16 %v370
    %v442 = vunpack.c.h.bf16 %v370
    %v443 = vunpack.c.l.bf16 %v371
    %v444 = vunpack.c.h.bf16 %v371
    %v445 = vunpack.c.l.bf16 %v372
    %v446 = vunpack.c.h.bf16 %v372
    %v447 = vunpack.c.l.bf16 %v373
    %v448 = vunpack.c.h.bf16 %v373
    %v449 = vunpack.c.l.bf16 %v374
    %v450 = vunpack.c.h.bf16 %v374
    %v451 = vunpack.c.l.bf16 %v375
    %v452 = vunpack.c.h.bf16 %v375
    %v453 = vunpack.c.l.bf16 %v376
    %v454 = vunpack.c.h.bf16 %v376
    %v455 = vunpack.c.l.bf16 %v377
    %v456 = vunpack.c.h.bf16 %v377
    %v457 = vunpack.c.l.bf16 %v378
    %v458 = vunpack.c.h.bf16 %v378
    %v459 = vunpack.c.l.bf16 %v379
    %v460 = vunpack.c.h.bf16 %v379
    %v461 = vunpack.c.l.bf16 %v380
    %v462 = vunpack.c.h.bf16 %v380
    %v463 = vunpack.c.l.bf16 %v381
    %v464 = vunpack.c.h.bf16 %v381
    %v465 = vunpack.c.l.bf16 %v382
    %v466 = vunpack.c.h.bf16 %v382
    %v467 = vunpack.c.l.bf16 %v383
    %v468 = vunpack.c.h.bf16 %v383
    %v469 = vunpack.c.l.bf16 %v384
    %v470 = vunpack.c.h.bf16 %v384
    %v471 = vunpack.c.l.bf16 %v385
    %v472 = vunpack.c.h.bf16 %v385
    %v473 = vunpack.c.l.bf16 %v386
    %v474 = vunpack.c.h.bf16 %v386
    %v475 = vunpack.c.l.bf16 %v387
    %v476 = vunpack.c.h.bf16 %v387
    %v477 = vunpack.c.l.bf16 %v388
    %v478 = vunpack.c.h.bf16 %v388
    %v479 = vunpack.c.l.bf16 %v389
    %v480 = vunpack.c.h.bf16 %v389
    %v481 = vunpack.c.l.bf16 %v390
    %v482 = vunpack.c.h.bf16 %v390
    %v483 = vunpack.c.l.bf16 %v391
    %v484 = vunpack.c.h.bf16 %v391
    %v485 = vunpack.c.l.bf16 %v392
    %v486 = vunpack.c.h.bf16 %v392
    %v487 = vunpack.c.l.bf16 %v393
    %v488 = vunpack.c.h.bf16 %v393
    %v489 = vunpack.c.l.bf16 %v394
    %v490 = vunpack.c.h.bf16 %v394
    %s491 = scalar_lea.vmem %s5, 1
    %v492 = vld [vmem:[%s491] ss:$8 sm:$0x3]
    %v494 = vlaneseq
    %v495 = vshrl.u32 %v494, 7
    %v496 = vsub.s32 0, %v495
    %v497 = vrot.slane %v492, %v496
    %v498 = vlaneseq
    %v499 = vshrl.u32 %v498, 7
    %v500 = vsub.s32 1, %v499
    %v501 = vrot.slane %v492, %v500
    %504 = vmatprep.subr.mxu0 %v396
    %505 = vmatpush1.msra.mxu0 %v395
    %506 = vmatprep.subr.mxu0 %v398
    %507 = vmatpush1.msra.mxu0 %v397
    %508 = vmatprep.subr.mxu0 %v400
    %509 = vmatpush1.msra.mxu0 %v399
    %510 = vmatprep.subr.mxu0 %v402
    %511 = vmatpush1.msra.mxu0 %v401
    %512 = vmatprep.subr.mxu0 %v404
    %513 = vmatpush1.msra.mxu0 %v403
    %514 = vmatprep.subr.mxu0 %v406
    %515 = vmatpush1.msra.mxu0 %v405
    %516 = vmatprep.subr.mxu0 %v408
    %517 = vmatpush1.msra.mxu0 %v407
    %518 = vmatprep.subr.mxu0 %v410
    %519 = vmatpush1.msra.mxu0 %v409
    %520 = vmatprep.subr.mxu0 %v412
    %521 = vmatpush1.msra.mxu0 %v411
    %522 = vmatprep.subr.mxu0 %v414
    %523 = vmatpush1.msra.mxu0 %v413
    %524 = vmatprep.subr.mxu0 %v416
    %525 = vmatpush1.msra.mxu0 %v415
    %526 = vmatprep.subr.mxu0 %v418
    %527 = vmatpush1.msra.mxu0 %v417
    %528 = vmatprep.subr.mxu0 %v420
    %529 = vmatpush1.msra.mxu0 %v419
    %530 = vmatprep.subr.mxu0 %v422
    %531 = vmatpush1.msra.mxu0 %v421
    %532 = vmatprep.subr.mxu0 %v424
    %533 = vmatpush1.msra.mxu0 %v423
    %534 = vmatprep.subr.mxu0 %v426
    %535 = vmatpush1.msra.mxu0 %v425
    %536 = vmatprep.subr.mxu0 %v428
    %537 = vmatpush1.msra.mxu0 %v427
    %538 = vmatprep.subr.mxu0 %v430
    %539 = vmatpush1.msra.mxu0 %v429
    %540 = vmatprep.subr.mxu0 %v432
    %541 = vmatpush1.msra.mxu0 %v431
    %542 = vmatprep.subr.mxu0 %v434
    %543 = vmatpush1.msra.mxu0 %v433
    %544 = vmatprep.subr.mxu0 %v436
    %545 = vmatpush1.msra.mxu0 %v435
    %546 = vmatprep.subr.mxu0 %v438
    %547 = vmatpush1.msra.mxu0 %v437
    %548 = vmatprep.subr.mxu0 %v440
    %549 = vmatpush1.msra.mxu0 %v439
    %550 = vmatprep.subr.mxu0 %v442
    %551 = vmatpush1.msra.mxu0 %v441
    %552 = vmatprep.subr.mxu0 %v444
    %553 = vmatpush1.msra.mxu0 %v443
    %554 = vmatprep.subr.mxu0 %v446
    %555 = vmatpush1.msra.mxu0 %v445
    %556 = vmatprep.subr.mxu0 %v448
    %557 = vmatpush1.msra.mxu0 %v447
    %558 = vmatprep.subr.mxu0 %v450
    %559 = vmatpush1.msra.mxu0 %v449
    %560 = vmatprep.subr.mxu0 %v452
    %561 = vmatpush1.msra.mxu0 %v451
    %562 = vmatprep.subr.mxu0 %v454
    %563 = vmatpush1.msra.mxu0 %v453
    %564 = vmatprep.subr.mxu0 %v456
    %565 = vmatpush1.msra.mxu0 %v455
    %566 = vmatprep.subr.mxu0 %v458
    %567 = vmatpush1.msra.mxu0 %v457
    %568 = vmatprep.mubr.f32.mxu0 %v345
    %569 = vmatmul.mubr.f32.gmra.mrb[0].mxu0 %v341
    %v570 = vpop.f32.mrb[0].mxu0
    %v571 = vadd.f32 %v497, %v570
    %v572 = vpop.f32.mrb[0].mxu0
    %v573 = vadd.f32 %v501, %v572
    %574 = vdwg.mxu0
    %575 = vmatprep.subr.mxu0 %v460
    %576 = vmatpush1.msra.mxu0 %v459
    %577 = vmatprep.subr.mxu0 %v462
    %578 = vmatpush1.msra.mxu0 %v461
    %579 = vmatprep.subr.mxu0 %v464
    %580 = vmatpush1.msra.mxu0 %v463
    %581 = vmatprep.subr.mxu0 %v466
    %582 = vmatpush1.msra.mxu0 %v465
    %583 = vmatprep.subr.mxu0 %v468
    %584 = vmatpush1.msra.mxu0 %v467
    %585 = vmatprep.subr.mxu0 %v470
    %586 = vmatpush1.msra.mxu0 %v469
    %587 = vmatprep.subr.mxu0 %v472
    %588 = vmatpush1.msra.mxu0 %v471
    %589 = vmatprep.subr.mxu0 %v474
    %590 = vmatpush1.msra.mxu0 %v473
    %591 = vmatprep.subr.mxu0 %v476
    %592 = vmatpush1.msra.mxu0 %v475
    %593 = vmatprep.subr.mxu0 %v478
    %594 = vmatpush1.msra.mxu0 %v477
    %595 = vmatprep.subr.mxu0 %v480
    %596 = vmatpush1.msra.mxu0 %v479
    %597 = vmatprep.subr.mxu0 %v482
    %598 = vmatpush1.msra.mxu0 %v481
    %599 = vmatprep.subr.mxu0 %v484
    %600 = vmatpush1.msra.mxu0 %v483
    %601 = vmatprep.subr.mxu0 %v486
    %602 = vmatpush1.msra.mxu0 %v485
    %603 = vmatprep.subr.mxu0 %v488
    %604 = vmatpush1.msra.mxu0 %v487
    %605 = vmatprep.subr.mxu0 %v490
    %606 = vmatpush1.msra.mxu0 %v489
    %607 = vmatprep.subr.mxu0 0.0
    %608 = vmatpush1.msra.mxu0 0.0
    %609 = vmatprep.subr.mxu0 0.0
    %610 = vmatpush1.msra.mxu0 0.0
    %611 = vmatprep.subr.mxu0 0.0
    %612 = vmatpush1.msra.mxu0 0.0
    %613 = vmatprep.subr.mxu0 0.0
    %614 = vmatpush1.msra.mxu0 0.0
    %615 = vmatprep.subr.mxu0 0.0
    %616 = vmatpush1.msra.mxu0 0.0
    %617 = vmatprep.subr.mxu0 0.0
    %618 = vmatpush1.msra.mxu0 0.0
    %619 = vmatprep.subr.mxu0 0.0
    %620 = vmatpush1.msra.mxu0 0.0
    %621 = vmatprep.subr.mxu0 0.0
    %622 = vmatpush1.msra.mxu0 0.0
    %623 = vmatprep.subr.mxu0 0.0
    %624 = vmatpush1.msra.mxu0 0.0
    %625 = vmatprep.subr.mxu0 0.0
    %626 = vmatpush1.msra.mxu0 0.0
    %627 = vmatprep.subr.mxu0 0.0
    %628 = vmatpush1.msra.mxu0 0.0
    %629 = vmatprep.subr.mxu0 0.0
    %630 = vmatpush1.msra.mxu0 0.0
    %631 = vmatprep.subr.mxu0 0.0
    %632 = vmatpush1.msra.mxu0 0.0
    %633 = vmatprep.subr.mxu0 0.0
    %634 = vmatpush1.msra.mxu0 0.0
    %635 = vmatprep.subr.mxu0 0.0
    %636 = vmatpush1.msra.mxu0 0.0
    %637 = vmatprep.subr.mxu0 0.0
    %638 = vmatpush1.msra.mxu0 0.0
    %639 = vmatprep.mubr.f32.mxu0 0.0
    %640 = vmatmul.mubr.f32.gmra.mrb[0].mxu0 %v337
    %v641 = vpop.f32.mrb[0].mxu0
    %v642 = vadd.f32 %v571, %v641
    %v643 = vpop.f32.mrb[0].mxu0
    %v644 = vadd.f32 %v573, %v643
    %645 = vdwg.mxu0
    %v646 = vmax.f32 %v642, 0.0
    %v647 = vmax.f32 %v644, 0.0
    %v648 = vld [vmem:[#allocation6] sm:$0xff]
    %v649 = vld [vmem:[#allocation6 + $0x8] sm:$0xff]
    %v650 = vld [vmem:[#allocation6 + $0x10] sm:$0xff]
    %v651 = vld [vmem:[#allocation6 + $0x18] sm:$0xff]
    %v652 = vld [vmem:[#allocation6 + $0x20] sm:$0xff]
    %v653 = vld [vmem:[#allocation6 + $0x28] sm:$0xff]
    %v654 = vld [vmem:[#allocation6 + $0x30] sm:$0xff]
    %v655 = vld [vmem:[#allocation6 + $0x38] sm:$0xff]
    %v656 = vld [vmem:[#allocation6 + $0x40] sm:$0xff]
    %v657 = vld [vmem:[#allocation6 + $0x48] sm:$0xff]
    %v658 = vld [vmem:[#allocation6 + $0x50] sm:$0xff]
    %v659 = vld [vmem:[#allocation6 + $0x58] sm:$0xff]
    %v660 = vld [vmem:[#allocation6 + $0x60] sm:$0xff]
    %v661 = vld [vmem:[#allocation6 + $0x68] sm:$0xff]
    %v662 = vld [vmem:[#allocation6 + $0x70] sm:$0xff]
    %v663 = vld [vmem:[#allocation6 + $0x78] sm:$0xff]
    %v664 = vld [vmem:[#allocation6 + $0x80] sm:$0xff]
    %v665 = vld [vmem:[#allocation6 + $0x88] sm:$0xff]
    %v666 = vld [vmem:[#allocation6 + $0x90] sm:$0xff]
    %v667 = vld [vmem:[#allocation6 + $0x98] sm:$0xff]
    %v668 = vld [vmem:[#allocation6 + $0xa0] sm:$0xff]
    %v669 = vld [vmem:[#allocation6 + $0xa8] sm:$0xff]
    %v670 = vld [vmem:[#allocation6 + $0xb0] sm:$0xff]
    %v671 = vld [vmem:[#allocation6 + $0xb8] sm:$0xff]
    %v672 = vld [vmem:[#allocation6 + $0xc0] sm:$0xff]
    %v673 = vld [vmem:[#allocation6 + $0xc8] sm:$0xff]
    %v674 = vld [vmem:[#allocation6 + $0xd0] sm:$0xff]
    %v675 = vld [vmem:[#allocation6 + $0xd8] sm:$0xff]
    %v676 = vld [vmem:[#allocation6 + $0xe0] sm:$0xff]
    %v677 = vld [vmem:[#allocation6 + $0xe8] sm:$0xff]
    %v678 = vld [vmem:[#allocation6 + $0xf0] sm:$0xff]
    %v679 = vld [vmem:[#allocation6 + $0xf8] sm:$0xff]
    %v680 = vunpack.c.l.bf16 %v648
    %v681 = vunpack.c.h.bf16 %v648
    %v682 = vunpack.c.l.bf16 %v649
    %v683 = vunpack.c.h.bf16 %v649
    %v684 = vunpack.c.l.bf16 %v650
    %v685 = vunpack.c.h.bf16 %v650
    %v686 = vunpack.c.l.bf16 %v651
    %v687 = vunpack.c.h.bf16 %v651
    %v688 = vunpack.c.l.bf16 %v652
    %v689 = vunpack.c.h.bf16 %v652
    %v690 = vunpack.c.l.bf16 %v653
    %v691 = vunpack.c.h.bf16 %v653
    %v692 = vunpack.c.l.bf16 %v654
    %v693 = vunpack.c.h.bf16 %v654
    %v694 = vunpack.c.l.bf16 %v655
    %v695 = vunpack.c.h.bf16 %v655
    %v696 = vunpack.c.l.bf16 %v656
    %v697 = vunpack.c.h.bf16 %v656
    %v698 = vunpack.c.l.bf16 %v657
    %v699 = vunpack.c.h.bf16 %v657
    %v700 = vunpack.c.l.bf16 %v658
    %v701 = vunpack.c.h.bf16 %v658
    %v702 = vunpack.c.l.bf16 %v659
    %v703 = vunpack.c.h.bf16 %v659
    %v704 = vunpack.c.l.bf16 %v660
    %v705 = vunpack.c.h.bf16 %v660
    %v706 = vunpack.c.l.bf16 %v661
    %v707 = vunpack.c.h.bf16 %v661
    %v708 = vunpack.c.l.bf16 %v662
    %v709 = vunpack.c.h.bf16 %v662
    %v710 = vunpack.c.l.bf16 %v663
    %v711 = vunpack.c.h.bf16 %v663
    %v712 = vunpack.c.l.bf16 %v664
    %v713 = vunpack.c.h.bf16 %v664
    %v714 = vunpack.c.l.bf16 %v665
    %v715 = vunpack.c.h.bf16 %v665
    %v716 = vunpack.c.l.bf16 %v666
    %v717 = vunpack.c.h.bf16 %v666
    %v718 = vunpack.c.l.bf16 %v667
    %v719 = vunpack.c.h.bf16 %v667
    %v720 = vunpack.c.l.bf16 %v668
    %v721 = vunpack.c.h.bf16 %v668
    %v722 = vunpack.c.l.bf16 %v669
    %v723 = vunpack.c.h.bf16 %v669
    %v724 = vunpack.c.l.bf16 %v670
    %v725 = vunpack.c.h.bf16 %v670
    %v726 = vunpack.c.l.bf16 %v671
    %v727 = vunpack.c.h.bf16 %v671
    %v728 = vunpack.c.l.bf16 %v672
    %v729 = vunpack.c.h.bf16 %v672
    %v730 = vunpack.c.l.bf16 %v673
    %v731 = vunpack.c.h.bf16 %v673
    %v732 = vunpack.c.l.bf16 %v674
    %v733 = vunpack.c.h.bf16 %v674
    %v734 = vunpack.c.l.bf16 %v675
    %v735 = vunpack.c.h.bf16 %v675
    %v736 = vunpack.c.l.bf16 %v676
    %v737 = vunpack.c.h.bf16 %v676
    %v738 = vunpack.c.l.bf16 %v677
    %v739 = vunpack.c.h.bf16 %v677
    %v740 = vunpack.c.l.bf16 %v678
    %v741 = vunpack.c.h.bf16 %v678
    %v742 = vunpack.c.l.bf16 %v679
    %v743 = vunpack.c.h.bf16 %v679
    %s744 = scalar_lea.vmem %s5, 2
    %v745 = vld [vmem:[%s744] ss:$8 sm:$0x3]
    %v747 = vlaneseq
    %v748 = vshrl.u32 %v747, 7
    %v749 = vsub.s32 0, %v748
    %v750 = vrot.slane %v745, %v749
    %v751 = vlaneseq
    %v752 = vshrl.u32 %v751, 7
    %v753 = vsub.s32 1, %v752
    %v754 = vrot.slane %v745, %v753
    %757 = vmatprep.subr.mxu0 %v681
    %758 = vmatpush1.msra.mxu0 %v680
    %759 = vmatprep.subr.mxu0 %v683
    %760 = vmatpush1.msra.mxu0 %v682
    %761 = vmatprep.subr.mxu0 %v685
    %762 = vmatpush1.msra.mxu0 %v684
    %763 = vmatprep.subr.mxu0 %v687
    %764 = vmatpush1.msra.mxu0 %v686
    %765 = vmatprep.subr.mxu0 %v689
    %766 = vmatpush1.msra.mxu0 %v688
    %767 = vmatprep.subr.mxu0 %v691
    %768 = vmatpush1.msra.mxu0 %v690
    %769 = vmatprep.subr.mxu0 %v693
    %770 = vmatpush1.msra.mxu0 %v692
    %771 = vmatprep.subr.mxu0 %v695
    %772 = vmatpush1.msra.mxu0 %v694
    %773 = vmatprep.subr.mxu0 %v697
    %774 = vmatpush1.msra.mxu0 %v696
    %775 = vmatprep.subr.mxu0 %v699
    %776 = vmatpush1.msra.mxu0 %v698
    %777 = vmatprep.subr.mxu0 %v701
    %778 = vmatpush1.msra.mxu0 %v700
    %779 = vmatprep.subr.mxu0 %v703
    %780 = vmatpush1.msra.mxu0 %v702
    %781 = vmatprep.subr.mxu0 %v705
    %782 = vmatpush1.msra.mxu0 %v704
    %783 = vmatprep.subr.mxu0 %v707
    %784 = vmatpush1.msra.mxu0 %v706
    %785 = vmatprep.subr.mxu0 %v709
    %786 = vmatpush1.msra.mxu0 %v708
    %787 = vmatprep.subr.mxu0 %v711
    %788 = vmatpush1.msra.mxu0 %v710
    %789 = vmatprep.subr.mxu0 %v713
    %790 = vmatpush1.msra.mxu0 %v712
    %791 = vmatprep.subr.mxu0 %v715
    %792 = vmatpush1.msra.mxu0 %v714
    %793 = vmatprep.subr.mxu0 %v717
    %794 = vmatpush1.msra.mxu0 %v716
    %795 = vmatprep.subr.mxu0 %v719
    %796 = vmatpush1.msra.mxu0 %v718
    %797 = vmatprep.subr.mxu0 %v721
    %798 = vmatpush1.msra.mxu0 %v720
    %799 = vmatprep.subr.mxu0 %v723
    %800 = vmatpush1.msra.mxu0 %v722
    %801 = vmatprep.subr.mxu0 %v725
    %802 = vmatpush1.msra.mxu0 %v724
    %803 = vmatprep.subr.mxu0 %v727
    %804 = vmatpush1.msra.mxu0 %v726
    %805 = vmatprep.subr.mxu0 %v729
    %806 = vmatpush1.msra.mxu0 %v728
    %807 = vmatprep.subr.mxu0 %v731
    %808 = vmatpush1.msra.mxu0 %v730
    %809 = vmatprep.subr.mxu0 %v733
    %810 = vmatpush1.msra.mxu0 %v732
    %811 = vmatprep.subr.mxu0 %v735
    %812 = vmatpush1.msra.mxu0 %v734
    %813 = vmatprep.subr.mxu0 %v737
    %814 = vmatpush1.msra.mxu0 %v736
    %815 = vmatprep.subr.mxu0 %v739
    %816 = vmatpush1.msra.mxu0 %v738
    %817 = vmatprep.subr.mxu0 %v741
    %818 = vmatpush1.msra.mxu0 %v740
    %819 = vmatprep.subr.mxu0 %v743
    %820 = vmatpush1.msra.mxu0 %v742
    %821 = vmatprep.mubr.f32.mxu0 %v647
    %822 = vmatmul.mubr.f32.gmra.mrb[0].mxu0 %v646
    %v823 = vpop.f32.mrb[0].mxu0
    %v824 = vadd.f32 %v750, %v823
    %v825 = vpop.f32.mrb[0].mxu0
    %v826 = vadd.f32 %v754, %v825
    %827 = vdwg.mxu0
    %v828 = vmax.f32 %v824, 0.0
    %v829 = vmax.f32 %v826, 0.0
    %s830 = scalar_lea.vmem [#allocation6], 256
    %v831 = vld [vmem:[%s830] sm:$0xff]
    %v832 = vld [vmem:[%s830 + $0x8] sm:$0xff]
    %v833 = vld [vmem:[%s830 + $0x10] sm:$0xff]
    %v834 = vld [vmem:[%s830 + $0x18] sm:$0xff]
    %v835 = vld [vmem:[%s830 + $0x20] sm:$0xff]
    %v836 = vld [vmem:[%s830 + $0x28] sm:$0xff]
    %v837 = vld [vmem:[%s830 + $0x30] sm:$0xff]
    %v838 = vld [vmem:[%s830 + $0x38] sm:$0xff]
    %v839 = vld [vmem:[%s830 + $0x40] sm:$0xff]
    %v840 = vld [vmem:[%s830 + $0x48] sm:$0xff]
    %v841 = vld [vmem:[%s830 + $0x50] sm:$0xff]
    %v842 = vld [vmem:[%s830 + $0x58] sm:$0xff]
    %v843 = vld [vmem:[%s830 + $0x60] sm:$0xff]
    %v844 = vld [vmem:[%s830 + $0x68] sm:$0xff]
    %v845 = vld [vmem:[%s830 + $0x70] sm:$0xff]
    %v846 = vld [vmem:[%s830 + $0x78] sm:$0xff]
    %v847 = vld [vmem:[%s830 + $0x80] sm:$0xff]
    %v848 = vld [vmem:[%s830 + $0x88] sm:$0xff]
    %v849 = vld [vmem:[%s830 + $0x90] sm:$0xff]
    %v850 = vld [vmem:[%s830 + $0x98] sm:$0xff]
    %v851 = vld [vmem:[%s830 + $0xa0] sm:$0xff]
    %v852 = vld [vmem:[%s830 + $0xa8] sm:$0xff]
    %v853 = vld [vmem:[%s830 + $0xb0] sm:$0xff]
    %v854 = vld [vmem:[%s830 + $0xb8] sm:$0xff]
    %v855 = vld [vmem:[%s830 + $0xc0] sm:$0xff]
    %v856 = vld [vmem:[%s830 + $0xc8] sm:$0xff]
    %v857 = vld [vmem:[%s830 + $0xd0] sm:$0xff]
    %v858 = vld [vmem:[%s830 + $0xd8] sm:$0xff]
    %v859 = vld [vmem:[%s830 + $0xe0] sm:$0xff]
    %v860 = vld [vmem:[%s830 + $0xe8] sm:$0xff]
    %v861 = vld [vmem:[%s830 + $0xf0] sm:$0xff]
    %v862 = vld [vmem:[%s830 + $0xf8] sm:$0xff]
    %v863 = vunpack.c.l.bf16 %v831
    %v864 = vunpack.c.h.bf16 %v831
    %v865 = vunpack.c.l.bf16 %v832
    %v866 = vunpack.c.h.bf16 %v832
    %v867 = vunpack.c.l.bf16 %v833
    %v868 = vunpack.c.h.bf16 %v833
    %v869 = vunpack.c.l.bf16 %v834
    %v870 = vunpack.c.h.bf16 %v834
    %v871 = vunpack.c.l.bf16 %v835
    %v872 = vunpack.c.h.bf16 %v835
    %v873 = vunpack.c.l.bf16 %v836
    %v874 = vunpack.c.h.bf16 %v836
    %v875 = vunpack.c.l.bf16 %v837
    %v876 = vunpack.c.h.bf16 %v837
    %v877 = vunpack.c.l.bf16 %v838
    %v878 = vunpack.c.h.bf16 %v838
    %v879 = vunpack.c.l.bf16 %v839
    %v880 = vunpack.c.h.bf16 %v839
    %v881 = vunpack.c.l.bf16 %v840
    %v882 = vunpack.c.h.bf16 %v840
    %v883 = vunpack.c.l.bf16 %v841
    %v884 = vunpack.c.h.bf16 %v841
    %v885 = vunpack.c.l.bf16 %v842
    %v886 = vunpack.c.h.bf16 %v842
    %v887 = vunpack.c.l.bf16 %v843
    %v888 = vunpack.c.h.bf16 %v843
    %v889 = vunpack.c.l.bf16 %v844
    %v890 = vunpack.c.h.bf16 %v844
    %v891 = vunpack.c.l.bf16 %v845
    %v892 = vunpack.c.h.bf16 %v845
    %v893 = vunpack.c.l.bf16 %v846
    %v894 = vunpack.c.h.bf16 %v846
    %v895 = vunpack.c.l.bf16 %v847
    %v896 = vunpack.c.h.bf16 %v847
    %v897 = vunpack.c.l.bf16 %v848
    %v898 = vunpack.c.h.bf16 %v848
    %v899 = vunpack.c.l.bf16 %v849
    %v900 = vunpack.c.h.bf16 %v849
    %v901 = vunpack.c.l.bf16 %v850
    %v902 = vunpack.c.h.bf16 %v850
    %v903 = vunpack.c.l.bf16 %v851
    %v904 = vunpack.c.h.bf16 %v851
    %v905 = vunpack.c.l.bf16 %v852
    %v906 = vunpack.c.h.bf16 %v852
    %v907 = vunpack.c.l.bf16 %v853
    %v908 = vunpack.c.h.bf16 %v853
    %v909 = vunpack.c.l.bf16 %v854
    %v910 = vunpack.c.h.bf16 %v854
    %v911 = vunpack.c.l.bf16 %v855
    %v912 = vunpack.c.h.bf16 %v855
    %v913 = vunpack.c.l.bf16 %v856
    %v914 = vunpack.c.h.bf16 %v856
    %v915 = vunpack.c.l.bf16 %v857
    %v916 = vunpack.c.h.bf16 %v857
    %v917 = vunpack.c.l.bf16 %v858
    %v918 = vunpack.c.h.bf16 %v858
    %v919 = vunpack.c.l.bf16 %v859
    %v920 = vunpack.c.h.bf16 %v859
    %v921 = vunpack.c.l.bf16 %v860
    %v922 = vunpack.c.h.bf16 %v860
    %v923 = vunpack.c.l.bf16 %v861
    %v924 = vunpack.c.h.bf16 %v861
    %v925 = vunpack.c.l.bf16 %v862
    %v926 = vunpack.c.h.bf16 %v862
    %s927 = scalar_lea.vmem %s5, 3
    %v928 = vld [vmem:[%s927] ss:$8 sm:$0x3]
    %v930 = vlaneseq
    %v931 = vshrl.u32 %v930, 7
    %v932 = vsub.s32 0, %v931
    %v933 = vrot.slane %v928, %v932
    %v934 = vlaneseq
    %v935 = vshrl.u32 %v934, 7
    %v936 = vsub.s32 1, %v935
    %v937 = vrot.slane %v928, %v936
    %940 = vmatprep.subr.mxu0 %v864
    %941 = vmatpush1.msra.mxu0 %v863
    %942 = vmatprep.subr.mxu0 %v866
    %943 = vmatpush1.msra.mxu0 %v865
    %944 = vmatprep.subr.mxu0 %v868
    %945 = vmatpush1.msra.mxu0 %v867
    %946 = vmatprep.subr.mxu0 %v870
    %947 = vmatpush1.msra.mxu0 %v869
    %948 = vmatprep.subr.mxu0 %v872
    %949 = vmatpush1.msra.mxu0 %v871
    %950 = vmatprep.subr.mxu0 %v874
    %951 = vmatpush1.msra.mxu0 %v873
    %952 = vmatprep.subr.mxu0 %v876
    %953 = vmatpush1.msra.mxu0 %v875
    %954 = vmatprep.subr.mxu0 %v878
    %955 = vmatpush1.msra.mxu0 %v877
    %956 = vmatprep.subr.mxu0 %v880
    %957 = vmatpush1.msra.mxu0 %v879
    %958 = vmatprep.subr.mxu0 %v882
    %959 = vmatpush1.msra.mxu0 %v881
    %960 = vmatprep.subr.mxu0 %v884
    %961 = vmatpush1.msra.mxu0 %v883
    %962 = vmatprep.subr.mxu0 %v886
    %963 = vmatpush1.msra.mxu0 %v885
    %964 = vmatprep.subr.mxu0 %v888
    %965 = vmatpush1.msra.mxu0 %v887
    %966 = vmatprep.subr.mxu0 %v890
    %967 = vmatpush1.msra.mxu0 %v889
    %968 = vmatprep.subr.mxu0 %v892
    %969 = vmatpush1.msra.mxu0 %v891
    %970 = vmatprep.subr.mxu0 %v894
    %971 = vmatpush1.msra.mxu0 %v893
    %972 = vmatprep.subr.mxu0 %v896
    %973 = vmatpush1.msra.mxu0 %v895
    %974 = vmatprep.subr.mxu0 %v898
    %975 = vmatpush1.msra.mxu0 %v897
    %976 = vmatprep.subr.mxu0 %v900
    %977 = vmatpush1.msra.mxu0 %v899
    %978 = vmatprep.subr.mxu0 %v902
    %979 = vmatpush1.msra.mxu0 %v901
    %980 = vmatprep.subr.mxu0 %v904
    %981 = vmatpush1.msra.mxu0 %v903
    %982 = vmatprep.subr.mxu0 %v906
    %983 = vmatpush1.msra.mxu0 %v905
    %984 = vmatprep.subr.mxu0 %v908
    %985 = vmatpush1.msra.mxu0 %v907
    %986 = vmatprep.subr.mxu0 %v910
    %987 = vmatpush1.msra.mxu0 %v909
    %988 = vmatprep.subr.mxu0 %v912
    %989 = vmatpush1.msra.mxu0 %v911
    %990 = vmatprep.subr.mxu0 %v914
    %991 = vmatpush1.msra.mxu0 %v913
    %992 = vmatprep.subr.mxu0 %v916
    %993 = vmatpush1.msra.mxu0 %v915
    %994 = vmatprep.subr.mxu0 %v918
    %995 = vmatpush1.msra.mxu0 %v917
    %996 = vmatprep.subr.mxu0 %v920
    %997 = vmatpush1.msra.mxu0 %v919
    %998 = vmatprep.subr.mxu0 %v922
    %999 = vmatpush1.msra.mxu0 %v921
    %1000 = vmatprep.subr.mxu0 %v924
    %1001 = vmatpush1.msra.mxu0 %v923
    %1002 = vmatprep.subr.mxu0 %v926
    %1003 = vmatpush1.msra.mxu0 %v925
    %1004 = vmatprep.mubr.f32.mxu0 %v829
    %1005 = vmatmul.mubr.f32.gmra.mrb[0].mxu0 %v828
    %v1006 = vpop.f32.mrb[0].mxu0
    %v1007 = vadd.f32 %v933, %v1006
    %v1008 = vpop.f32.mrb[0].mxu0
    %v1009 = vadd.f32 %v937, %v1008
    %1010 = vdwg.mxu0
    %v1011 = vmax.f32 %v1007, 0.0
    %v1012 = vmax.f32 %v1009, 0.0
    %s1013 = scalar_lea.vmem [#allocation6], 512
    %v1014 = vld [vmem:[%s1013] sm:$0xff]
    %v1015 = vld [vmem:[%s1013 + $0x8] sm:$0xff]
    %v1016 = vld [vmem:[%s1013 + $0x10] sm:$0xff]
    %v1017 = vld [vmem:[%s1013 + $0x18] sm:$0xff]
    %v1018 = vld [vmem:[%s1013 + $0x20] sm:$0xff]
    %v1019 = vld [vmem:[%s1013 + $0x28] sm:$0xff]
    %v1020 = vld [vmem:[%s1013 + $0x30] sm:$0xff]
    %v1021 = vld [vmem:[%s1013 + $0x38] sm:$0xff]
    %v1022 = vld [vmem:[%s1013 + $0x40] sm:$0xff]
    %v1023 = vld [vmem:[%s1013 + $0x48] sm:$0xff]
    %v1024 = vld [vmem:[%s1013 + $0x50] sm:$0xff]
    %v1025 = vld [vmem:[%s1013 + $0x58] sm:$0xff]
    %v1026 = vld [vmem:[%s1013 + $0x60] sm:$0xff]
    %v1027 = vld [vmem:[%s1013 + $0x68] sm:$0xff]
    %v1028 = vld [vmem:[%s1013 + $0x70] sm:$0xff]
    %v1029 = vld [vmem:[%s1013 + $0x78] sm:$0xff]
    %v1030 = vld [vmem:[%s1013 + $0x80] sm:$0xff]
    %v1031 = vld [vmem:[%s1013 + $0x88] sm:$0xff]
    %v1032 = vld [vmem:[%s1013 + $0x90] sm:$0xff]
    %v1033 = vld [vmem:[%s1013 + $0x98] sm:$0xff]
    %v1034 = vld [vmem:[%s1013 + $0xa0] sm:$0xff]
    %v1035 = vld [vmem:[%s1013 + $0xa8] sm:$0xff]
    %v1036 = vld [vmem:[%s1013 + $0xb0] sm:$0xff]
    %v1037 = vld [vmem:[%s1013 + $0xb8] sm:$0xff]
    %v1038 = vld [vmem:[%s1013 + $0xc0] sm:$0xff]
    %v1039 = vld [vmem:[%s1013 + $0xc8] sm:$0xff]
    %v1040 = vld [vmem:[%s1013 + $0xd0] sm:$0xff]
    %v1041 = vld [vmem:[%s1013 + $0xd8] sm:$0xff]
    %v1042 = vld [vmem:[%s1013 + $0xe0] sm:$0xff]
    %v1043 = vld [vmem:[%s1013 + $0xe8] sm:$0xff]
    %v1044 = vld [vmem:[%s1013 + $0xf0] sm:$0xff]
    %v1045 = vld [vmem:[%s1013 + $0xf8] sm:$0xff]
    %v1046 = vunpack.c.l.bf16 %v1014
    %v1047 = vunpack.c.h.bf16 %v1014
    %v1048 = vunpack.c.l.bf16 %v1015
    %v1049 = vunpack.c.h.bf16 %v1015
    %v1050 = vunpack.c.l.bf16 %v1016
    %v1051 = vunpack.c.h.bf16 %v1016
    %v1052 = vunpack.c.l.bf16 %v1017
    %v1053 = vunpack.c.h.bf16 %v1017
    %v1054 = vunpack.c.l.bf16 %v1018
    %v1055 = vunpack.c.h.bf16 %v1018
    %v1056 = vunpack.c.l.bf16 %v1019
    %v1057 = vunpack.c.h.bf16 %v1019
    %v1058 = vunpack.c.l.bf16 %v1020
    %v1059 = vunpack.c.h.bf16 %v1020
    %v1060 = vunpack.c.l.bf16 %v1021
    %v1061 = vunpack.c.h.bf16 %v1021
    %v1062 = vunpack.c.l.bf16 %v1022
    %v1063 = vunpack.c.h.bf16 %v1022
    %v1064 = vunpack.c.l.bf16 %v1023
    %v1065 = vunpack.c.h.bf16 %v1023
    %v1066 = vunpack.c.l.bf16 %v1024
    %v1067 = vunpack.c.h.bf16 %v1024
    %v1068 = vunpack.c.l.bf16 %v1025
    %v1069 = vunpack.c.h.bf16 %v1025
    %v1070 = vunpack.c.l.bf16 %v1026
    %v1071 = vunpack.c.h.bf16 %v1026
    %v1072 = vunpack.c.l.bf16 %v1027
    %v1073 = vunpack.c.h.bf16 %v1027
    %v1074 = vunpack.c.l.bf16 %v1028
    %v1075 = vunpack.c.h.bf16 %v1028
    %v1076 = vunpack.c.l.bf16 %v1029
    %v1077 = vunpack.c.h.bf16 %v1029
    %v1078 = vunpack.c.l.bf16 %v1030
    %v1079 = vunpack.c.h.bf16 %v1030
    %v1080 = vunpack.c.l.bf16 %v1031
    %v1081 = vunpack.c.h.bf16 %v1031
    %v1082 = vunpack.c.l.bf16 %v1032
    %v1083 = vunpack.c.h.bf16 %v1032
    %v1084 = vunpack.c.l.bf16 %v1033
    %v1085 = vunpack.c.h.bf16 %v1033
    %v1086 = vunpack.c.l.bf16 %v1034
    %v1087 = vunpack.c.h.bf16 %v1034
    %v1088 = vunpack.c.l.bf16 %v1035
    %v1089 = vunpack.c.h.bf16 %v1035
    %v1090 = vunpack.c.l.bf16 %v1036
    %v1091 = vunpack.c.h.bf16 %v1036
    %v1092 = vunpack.c.l.bf16 %v1037
    %v1093 = vunpack.c.h.bf16 %v1037
    %v1094 = vunpack.c.l.bf16 %v1038
    %v1095 = vunpack.c.h.bf16 %v1038
    %v1096 = vunpack.c.l.bf16 %v1039
    %v1097 = vunpack.c.h.bf16 %v1039
    %v1098 = vunpack.c.l.bf16 %v1040
    %v1099 = vunpack.c.h.bf16 %v1040
    %v1100 = vunpack.c.l.bf16 %v1041
    %v1101 = vunpack.c.h.bf16 %v1041
    %v1102 = vunpack.c.l.bf16 %v1042
    %v1103 = vunpack.c.h.bf16 %v1042
    %v1104 = vunpack.c.l.bf16 %v1043
    %v1105 = vunpack.c.h.bf16 %v1043
    %v1106 = vunpack.c.l.bf16 %v1044
    %v1107 = vunpack.c.h.bf16 %v1044
    %v1108 = vunpack.c.l.bf16 %v1045
    %v1109 = vunpack.c.h.bf16 %v1045
    %s1110 = scalar_lea.vmem %s5, 4
    %v1111 = vld [vmem:[%s1110] ss:$8 sm:$0x3]
    %v1113 = vlaneseq
    %v1114 = vshrl.u32 %v1113, 7
    %v1115 = vsub.s32 0, %v1114
    %v1116 = vrot.slane %v1111, %v1115
    %v1117 = vlaneseq
    %v1118 = vshrl.u32 %v1117, 7
    %v1119 = vsub.s32 1, %v1118
    %v1120 = vrot.slane %v1111, %v1119
    %1123 = vmatprep.subr.mxu0 %v1047
    %1124 = vmatpush1.msra.mxu0 %v1046
    %1125 = vmatprep.subr.mxu0 %v1049
    %1126 = vmatpush1.msra.mxu0 %v1048
    %1127 = vmatprep.subr.mxu0 %v1051
    %1128 = vmatpush1.msra.mxu0 %v1050
    %1129 = vmatprep.subr.mxu0 %v1053
    %1130 = vmatpush1.msra.mxu0 %v1052
    %1131 = vmatprep.subr.mxu0 %v1055
    %1132 = vmatpush1.msra.mxu0 %v1054
    %1133 = vmatprep.subr.mxu0 %v1057
    %1134 = vmatpush1.msra.mxu0 %v1056
    %1135 = vmatprep.subr.mxu0 %v1059
    %1136 = vmatpush1.msra.mxu0 %v1058
    %1137 = vmatprep.subr.mxu0 %v1061
    %1138 = vmatpush1.msra.mxu0 %v1060
    %1139 = vmatprep.subr.mxu0 %v1063
    %1140 = vmatpush1.msra.mxu0 %v1062
    %1141 = vmatprep.subr.mxu0 %v1065
    %1142 = vmatpush1.msra.mxu0 %v1064
    %1143 = vmatprep.subr.mxu0 %v1067
    %1144 = vmatpush1.msra.mxu0 %v1066
    %1145 = vmatprep.subr.mxu0 %v1069
    %1146 = vmatpush1.msra.mxu0 %v1068
    %1147 = vmatprep.subr.mxu0 %v1071
    %1148 = vmatpush1.msra.mxu0 %v1070
    %1149 = vmatprep.subr.mxu0 %v1073
    %1150 = vmatpush1.msra.mxu0 %v1072
    %1151 = vmatprep.subr.mxu0 %v1075
    %1152 = vmatpush1.msra.mxu0 %v1074
    %1153 = vmatprep.subr.mxu0 %v1077
    %1154 = vmatpush1.msra.mxu0 %v1076
    %1155 = vmatprep.subr.mxu0 %v1079
    %1156 = vmatpush1.msra.mxu0 %v1078
    %1157 = vmatprep.subr.mxu0 %v1081
    %1158 = vmatpush1.msra.mxu0 %v1080
    %1159 = vmatprep.subr.mxu0 %v1083
    %1160 = vmatpush1.msra.mxu0 %v1082
    %1161 = vmatprep.subr.mxu0 %v1085
    %1162 = vmatpush1.msra.mxu0 %v1084
    %1163 = vmatprep.subr.mxu0 %v1087
    %1164 = vmatpush1.msra.mxu0 %v1086
    %1165 = vmatprep.subr.mxu0 %v1089
    %1166 = vmatpush1.msra.mxu0 %v1088
    %1167 = vmatprep.subr.mxu0 %v1091
    %1168 = vmatpush1.msra.mxu0 %v1090
    %1169 = vmatprep.subr.mxu0 %v1093
    %1170 = vmatpush1.msra.mxu0 %v1092
    %1171 = vmatprep.subr.mxu0 %v1095
    %1172 = vmatpush1.msra.mxu0 %v1094
    %1173 = vmatprep.subr.mxu0 %v1097
    %1174 = vmatpush1.msra.mxu0 %v1096
    %1175 = vmatprep.subr.mxu0 %v1099
    %1176 = vmatpush1.msra.mxu0 %v1098
    %1177 = vmatprep.subr.mxu0 %v1101
    %1178 = vmatpush1.msra.mxu0 %v1100
    %1179 = vmatprep.subr.mxu0 %v1103
    %1180 = vmatpush1.msra.mxu0 %v1102
    %1181 = vmatprep.subr.mxu0 %v1105
    %1182 = vmatpush1.msra.mxu0 %v1104
    %1183 = vmatprep.subr.mxu0 %v1107
    %1184 = vmatpush1.msra.mxu0 %v1106
    %1185 = vmatprep.subr.mxu0 %v1109
    %1186 = vmatpush1.msra.mxu0 %v1108
    %1187 = vmatprep.mubr.f32.mxu0 %v1012
    %1188 = vmatmul.mubr.f32.gmra.mrb[0].mxu0 %v1011
    %v1189 = vpop.f32.mrb[0].mxu0
    %v1190 = vadd.f32 %v1116, %v1189
    %v1191 = vpop.f32.mrb[0].mxu0
    %v1192 = vadd.f32 %v1120, %v1191
    %1193 = vdwg.mxu0
    %v1194 = vmax.f32 %v1190, 0.0
    %v1195 = vmax.f32 %v1192, 0.0
    %s1196 = scalar_lea.vmem [#allocation6], 768
    %v1197 = vld [vmem:[%s1196] sm:$0xff]
    %v1198 = vld [vmem:[%s1196 + $0x8] sm:$0xff]
    %v1199 = vld [vmem:[%s1196 + $0x10] sm:$0xff]
    %v1200 = vld [vmem:[%s1196 + $0x18] sm:$0xff]
    %v1201 = vld [vmem:[%s1196 + $0x20] sm:$0xff]
    %v1202 = vld [vmem:[%s1196 + $0x28] sm:$0xff]
    %v1203 = vld [vmem:[%s1196 + $0x30] sm:$0xff]
    %v1204 = vld [vmem:[%s1196 + $0x38] sm:$0xff]
    %v1205 = vld [vmem:[%s1196 + $0x40] sm:$0xff]
    %v1206 = vld [vmem:[%s1196 + $0x48] sm:$0xff]
    %v1207 = vld [vmem:[%s1196 + $0x50] sm:$0xff]
    %v1208 = vld [vmem:[%s1196 + $0x58] sm:$0xff]
    %v1209 = vld [vmem:[%s1196 + $0x60] sm:$0xff]
    %v1210 = vld [vmem:[%s1196 + $0x68] sm:$0xff]
    %v1211 = vld [vmem:[%s1196 + $0x70] sm:$0xff]
    %v1212 = vld [vmem:[%s1196 + $0x78] sm:$0xff]
    %v1213 = vld [vmem:[%s1196 + $0x80] sm:$0xff]
    %v1214 = vld [vmem:[%s1196 + $0x88] sm:$0xff]
    %v1215 = vld [vmem:[%s1196 + $0x90] sm:$0xff]
    %v1216 = vld [vmem:[%s1196 + $0x98] sm:$0xff]
    %v1217 = vld [vmem:[%s1196 + $0xa0] sm:$0xff]
    %v1218 = vld [vmem:[%s1196 + $0xa8] sm:$0xff]
    %v1219 = vld [vmem:[%s1196 + $0xb0] sm:$0xff]
    %v1220 = vld [vmem:[%s1196 + $0xb8] sm:$0xff]
    %v1221 = vld [vmem:[%s1196 + $0xc0] sm:$0xff]
    %v1222 = vld [vmem:[%s1196 + $0xc8] sm:$0xff]
    %v1223 = vld [vmem:[%s1196 + $0xd0] sm:$0xff]
    %v1224 = vld [vmem:[%s1196 + $0xd8] sm:$0xff]
    %v1225 = vld [vmem:[%s1196 + $0xe0] sm:$0xff]
    %v1226 = vld [vmem:[%s1196 + $0xe8] sm:$0xff]
    %v1227 = vld [vmem:[%s1196 + $0xf0] sm:$0xff]
    %v1228 = vld [vmem:[%s1196 + $0xf8] sm:$0xff]
    %v1229 = vunpack.c.l.bf16 %v1197
    %v1230 = vunpack.c.h.bf16 %v1197
    %v1231 = vunpack.c.l.bf16 %v1198
    %v1232 = vunpack.c.h.bf16 %v1198
    %v1233 = vunpack.c.l.bf16 %v1199
    %v1234 = vunpack.c.h.bf16 %v1199
    %v1235 = vunpack.c.l.bf16 %v1200
    %v1236 = vunpack.c.h.bf16 %v1200
    %v1237 = vunpack.c.l.bf16 %v1201
    %v1238 = vunpack.c.h.bf16 %v1201
    %v1239 = vunpack.c.l.bf16 %v1202
    %v1240 = vunpack.c.h.bf16 %v1202
    %v1241 = vunpack.c.l.bf16 %v1203
    %v1242 = vunpack.c.h.bf16 %v1203
    %v1243 = vunpack.c.l.bf16 %v1204
    %v1244 = vunpack.c.h.bf16 %v1204
    %v1245 = vunpack.c.l.bf16 %v1205
    %v1246 = vunpack.c.h.bf16 %v1205
    %v1247 = vunpack.c.l.bf16 %v1206
    %v1248 = vunpack.c.h.bf16 %v1206
    %v1249 = vunpack.c.l.bf16 %v1207
    %v1250 = vunpack.c.h.bf16 %v1207
    %v1251 = vunpack.c.l.bf16 %v1208
    %v1252 = vunpack.c.h.bf16 %v1208
    %v1253 = vunpack.c.l.bf16 %v1209
    %v1254 = vunpack.c.h.bf16 %v1209
    %v1255 = vunpack.c.l.bf16 %v1210
    %v1256 = vunpack.c.h.bf16 %v1210
    %v1257 = vunpack.c.l.bf16 %v1211
    %v1258 = vunpack.c.h.bf16 %v1211
    %v1259 = vunpack.c.l.bf16 %v1212
    %v1260 = vunpack.c.h.bf16 %v1212
    %v1261 = vunpack.c.l.bf16 %v1213
    %v1262 = vunpack.c.h.bf16 %v1213
    %v1263 = vunpack.c.l.bf16 %v1214
    %v1264 = vunpack.c.h.bf16 %v1214
    %v1265 = vunpack.c.l.bf16 %v1215
    %v1266 = vunpack.c.h.bf16 %v1215
    %v1267 = vunpack.c.l.bf16 %v1216
    %v1268 = vunpack.c.h.bf16 %v1216
    %v1269 = vunpack.c.l.bf16 %v1217
    %v1270 = vunpack.c.h.bf16 %v1217
    %v1271 = vunpack.c.l.bf16 %v1218
    %v1272 = vunpack.c.h.bf16 %v1218
    %v1273 = vunpack.c.l.bf16 %v1219
    %v1274 = vunpack.c.h.bf16 %v1219
    %v1275 = vunpack.c.l.bf16 %v1220
    %v1276 = vunpack.c.h.bf16 %v1220
    %v1277 = vunpack.c.l.bf16 %v1221
    %v1278 = vunpack.c.h.bf16 %v1221
    %v1279 = vunpack.c.l.bf16 %v1222
    %v1280 = vunpack.c.h.bf16 %v1222
    %v1281 = vunpack.c.l.bf16 %v1223
    %v1282 = vunpack.c.h.bf16 %v1223
    %v1283 = vunpack.c.l.bf16 %v1224
    %v1284 = vunpack.c.h.bf16 %v1224
    %v1285 = vunpack.c.l.bf16 %v1225
    %v1286 = vunpack.c.h.bf16 %v1225
    %v1287 = vunpack.c.l.bf16 %v1226
    %v1288 = vunpack.c.h.bf16 %v1226
    %v1289 = vunpack.c.l.bf16 %v1227
    %v1290 = vunpack.c.h.bf16 %v1227
    %v1291 = vunpack.c.l.bf16 %v1228
    %v1292 = vunpack.c.h.bf16 %v1228
    %s1293 = scalar_lea.vmem %s5, 5
    %v1294 = vld [vmem:[%s1293] ss:$8 sm:$0x3]
    %v1296 = vlaneseq
    %v1297 = vshrl.u32 %v1296, 7
    %v1298 = vsub.s32 0, %v1297
    %v1299 = vrot.slane %v1294, %v1298
    %v1300 = vlaneseq
    %v1301 = vshrl.u32 %v1300, 7
    %v1302 = vsub.s32 1, %v1301
    %v1303 = vrot.slane %v1294, %v1302
    %1306 = vmatprep.subr.mxu0 %v1230
    %1307 = vmatpush1.msra.mxu0 %v1229
    %1308 = vmatprep.subr.mxu0 %v1232
    %1309 = vmatpush1.msra.mxu0 %v1231
    %1310 = vmatprep.subr.mxu0 %v1234
    %1311 = vmatpush1.msra.mxu0 %v1233
    %1312 = vmatprep.subr.mxu0 %v1236
    %1313 = vmatpush1.msra.mxu0 %v1235
    %1314 = vmatprep.subr.mxu0 %v1238
    %1315 = vmatpush1.msra.mxu0 %v1237
    %1316 = vmatprep.subr.mxu0 %v1240
    %1317 = vmatpush1.msra.mxu0 %v1239
    %1318 = vmatprep.subr.mxu0 %v1242
    %1319 = vmatpush1.msra.mxu0 %v1241
    %1320 = vmatprep.subr.mxu0 %v1244
    %1321 = vmatpush1.msra.mxu0 %v1243
    %1322 = vmatprep.subr.mxu0 %v1246
    %1323 = vmatpush1.msra.mxu0 %v1245
    %1324 = vmatprep.subr.mxu0 %v1248
    %1325 = vmatpush1.msra.mxu0 %v1247
    %1326 = vmatprep.subr.mxu0 %v1250
    %1327 = vmatpush1.msra.mxu0 %v1249
    %1328 = vmatprep.subr.mxu0 %v1252
    %1329 = vmatpush1.msra.mxu0 %v1251
    %1330 = vmatprep.subr.mxu0 %v1254
    %1331 = vmatpush1.msra.mxu0 %v1253
    %1332 = vmatprep.subr.mxu0 %v1256
    %1333 = vmatpush1.msra.mxu0 %v1255
    %1334 = vmatprep.subr.mxu0 %v1258
    %1335 = vmatpush1.msra.mxu0 %v1257
    %1336 = vmatprep.subr.mxu0 %v1260
    %1337 = vmatpush1.msra.mxu0 %v1259
    %1338 = vmatprep.subr.mxu0 %v1262
    %1339 = vmatpush1.msra.mxu0 %v1261
    %1340 = vmatprep.subr.mxu0 %v1264
    %1341 = vmatpush1.msra.mxu0 %v1263
    %1342 = vmatprep.subr.mxu0 %v1266
    %1343 = vmatpush1.msra.mxu0 %v1265
    %1344 = vmatprep.subr.mxu0 %v1268
    %1345 = vmatpush1.msra.mxu0 %v1267
    %1346 = vmatprep.subr.mxu0 %v1270
    %1347 = vmatpush1.msra.mxu0 %v1269
    %1348 = vmatprep.subr.mxu0 %v1272
    %1349 = vmatpush1.msra.mxu0 %v1271
    %1350 = vmatprep.subr.mxu0 %v1274
    %1351 = vmatpush1.msra.mxu0 %v1273
    %1352 = vmatprep.subr.mxu0 %v1276
    %1353 = vmatpush1.msra.mxu0 %v1275
    %1354 = vmatprep.subr.mxu0 %v1278
    %1355 = vmatpush1.msra.mxu0 %v1277
    %1356 = vmatprep.subr.mxu0 %v1280
    %1357 = vmatpush1.msra.mxu0 %v1279
    %1358 = vmatprep.subr.mxu0 %v1282
    %1359 = vmatpush1.msra.mxu0 %v1281
    %1360 = vmatprep.subr.mxu0 %v1284
    %1361 = vmatpush1.msra.mxu0 %v1283
    %1362 = vmatprep.subr.mxu0 %v1286
    %1363 = vmatpush1.msra.mxu0 %v1285
    %1364 = vmatprep.subr.mxu0 %v1288
    %1365 = vmatpush1.msra.mxu0 %v1287
    %1366 = vmatprep.subr.mxu0 %v1290
    %1367 = vmatpush1.msra.mxu0 %v1289
    %1368 = vmatprep.subr.mxu0 %v1292
    %1369 = vmatpush1.msra.mxu0 %v1291
    %1370 = vmatprep.mubr.f32.mxu0 %v1195
    %1371 = vmatmul.mubr.f32.gmra.mrb[0].mxu0 %v1194
    %v1372 = vpop.f32.mrb[0].mxu0
    %v1373 = vadd.f32 %v1299, %v1372
    %v1374 = vpop.f32.mrb[0].mxu0
    %v1375 = vadd.f32 %v1303, %v1374
    %1376 = vdwg.mxu0
    %v1377 = vxor.u32 %v1373, 2147483648
    %v1378 = vxor.u32 %v1375, 2147483648
    %v1379 = vmul.f32 %v1377, 1.442695
    %v1380 = vpow.pop %v1379
    %v1381 = vmul.f32 %v1378, 1.442695
    %v1382 = vpow.pop %v1381
    %v1383 = vadd.f32 %v1380, 1.0
    %v1384 = vadd.f32 %v1382, 1.0
    %v1385 = vrcp.pop %v1383
    %v1386 = vmul.f32 1.0, %v1385
    %v1387 = vrcp.pop %v1384
    %v1388 = vmul.f32 1.0, %v1387
    %v1391 = vcombine.low %v1386, %v1388
    %v1393 = vunpack.c.l.s4 1983009808
    %v1394 = vunpack.c.0.s8 %v1393
    %v1395 = vlaneseq
    %v1396 = vshrl.u32 %v1395, 7
    %v1397 = vsub.s32 %v1394, %v1396
    %v1398 = vrot.slane %v1391, %v1397
    %1400 = vst [vmem:[%s6] sm:$0xf] %v1398
    // Predicated region
    $region38: #{ffn_forward.1} parent=1 // pred_check
      _
    $region39: #{ffn_forward.1} parent=1 // pred_check_branch
      %1402 = sbr.rel (0) target = $region41
    $region40: #{ffn_forward.1} parent=1 // pred_region
      _
    $region41: #{ffn_forward.1} parent=1 // pred_fallthru
      _
    // Predicated region
    $region42: #{ffn_forward.1} parent=1 // pred_check
      _
    $region43: #{ffn_forward.1} parent=1 // pred_check_branch
      %1404 = sbr.rel (0) target = $region45
    $region44: #{ffn_forward.1} parent=1 // pred_region
      _
    $region45: #{ffn_forward.1} parent=1 // pred_fallthru
      _
    %1405 = vsyncpa [#allocation3], 1
    %1406 = vsyncpa [#allocation5], 1

</llo_original>
